<compile_context>
chip_gen: v7x
topology: tpu7x:2x2x1
jax: 0.10.0
libtpu: 0.0.40
codegen_flags: <defaults>
</compile_context>

<pallas_src>
import functools

import jax
import jax.numpy as jnp
from jax import lax
from jax.experimental import pallas as pl
from jax.experimental.pallas import tpu as pltpu


# ----------------------------- Pallas kernel -------------------------------


def gat_fused_kernel(x_ref, adj_ref, w_all_ref, a_src_ref, a_dst_ref,
                     w_out_ref, a_out_ref, out_ref, slab_ref,
                     *, alpha, n_heads, f_hid, n_class):
    """One graph's full GAT forward (eval mode), all operands in VMEM.

    x:      (N, Fin)
    adj:    (N, N) int8 (nonzero = edge)
    w_all:  (Fin, H*Fhid)          concat of per-head W
    a_src:  (H*Fhid, H)            block-diagonal, column h = a_src of head h
    a_dst:  (H, H*Fhid)            block-diagonal, row    h = a_dst of head h
    w_out:  (H*Fhid, C_pad)        original W_out zero-padded to 128 lanes
    a_out:  (2, C_pad)             zero-padded
    out:    (N, C_pad)             log_softmax(elu(...)), valid in [:, :n_class]
    slab:   (N, H*Fhid) VMEM scratch holding the ELU'd heads (lane-dense)
    """
    x = x_ref[...]

    # Edge mask held as booleans only (no (N,N) f32 bias buffer is kept live).
    edge_mask = adj_ref[...].astype(jnp.int32) > 0
    neg_big = jnp.float32(-1e12)

    # ---- ONE projection matmul for all heads ----
    hh_all = jnp.dot(x, w_all_ref[...], preferred_element_type=jnp.float32)   # (N, H*Fhid)

    # ---- batched attention-logit projections for all heads ----
    # f_src_all[i, h] = <hh_h[i], a_src_h>   ;   f_dst_all[h, j] = <hh_h[j], a_dst_h>
    f_src_all = jnp.dot(hh_all, a_src_ref[...],
                        preferred_element_type=jnp.float32)                    # (N, H)
    f_dst_all = lax.dot_general(a_dst_ref[...], hh_all, (((1,), (1,)), ((), ())),
                                preferred_element_type=jnp.float32)            # (H, N)

    def masked_attention(e_raw, h):
        # e_raw: (N, N) pre-activation scores; h: (N, F) values.
        e = jnp.where(e_raw > 0, e_raw, alpha * e_raw)        # LeakyReLU
        e = jnp.where(edge_mask, e, neg_big)                  # mask non-edges
        m = jnp.max(e, axis=1, keepdims=True)
        p = jnp.exp(e - m)                                    # UNnormalized probs
        denom = jnp.sum(p, axis=1, keepdims=True)
        acc = jnp.dot(p, h, preferred_element_type=jnp.float32)
        # Normalize AFTER the matmul: one (N, F) scale instead of an (N, N) pass.
        return acc * pl.reciprocal(denom, approx=False)

    def elu(v):
        # min() keeps exp() finite on the discarded positive branch.
        return jnp.where(v > 0, v, jnp.exp(jnp.minimum(v, 0.0)) - 1.0)

    # ---- hidden heads (concat=True) -> lane-dense VMEM slab ----
    # TODO(synk): for many heads move this static unroll to a grid axis.
    for hd in range(n_heads):
        hh = hh_all[:, hd * f_hid:(hd + 1) * f_hid]                       # static slice
        e_raw = f_src_all[:, hd:hd + 1] + f_dst_all[hd:hd + 1, :]          # (N, N)
        slab_ref[:, hd * f_hid:(hd + 1) * f_hid] = elu(masked_attention(e_raw, hh))

    # concat(heads) @ W_out as ONE matmul against the original (H*Fhid, C_pad) weight.
    h_out = jnp.dot(slab_ref[...], w_out_ref[...],
                    preferred_element_type=jnp.float32)                    # (N, C_pad)

    # ---- output attention layer (concat=False) ----
    a_out = a_out_ref[...]
    f_src_o = lax.dot_general(h_out, a_out[0:1, :], (((1,), (1,)), ((), ())),
                              preferred_element_type=jnp.float32)          # (N, 1)
    f_dst_o = lax.dot_general(a_out[1:2, :], h_out, (((1,), (1,)), ((), ())),
                              preferred_element_type=jnp.float32)          # (1, N)
    z = elu(masked_attention(f_src_o + f_dst_o, h_out))                    # (N, C_pad)

    # ---- log_softmax over the first n_class (valid) lanes only ----
    col = lax.broadcasted_iota(jnp.int32, z.shape, 1)
    valid = col < n_class
    zm = jnp.where(valid, z, neg_big)
    m = jnp.max(zm, axis=1, keepdims=True)
    se = jnp.sum(jnp.where(valid, jnp.exp(zm - m), 0.0), axis=1, keepdims=True)
    out_ref[...] = z - (jnp.log(se) + m)


# ------------------------------ JAX wrapper ---------------------------------


def gat_forward(params, x, adj, *, alpha):
    """GAT forward (eval mode). x: (N, Fin) or (G, N, Fin); adj matching (.., N, N)."""
    single = (x.ndim == 2)
    if single:
        x = x[None]
        adj = adj[None]
    x = x.astype(jnp.float32)
    G, N, f_in = x.shape

    heads = params["heads"]
    n_heads = len(heads)
    f_hid = heads[0][0].shape[1]
    hf = n_heads * f_hid

    # Fused projection weight and block-diagonal logit-projection matrices.
    w_all = jnp.concatenate([W for (W, _) in heads], axis=1)               # (Fin, H*Fhid)
    a_src_bd = jnp.zeros((hf, n_heads), jnp.float32)
    a_dst_bd = jnp.zeros((n_heads, hf), jnp.float32)
    for h, (_, a) in enumerate(heads):
        a_src_bd = a_src_bd.at[h * f_hid:(h + 1) * f_hid, h].set(a[:f_hid, 0])
        a_dst_bd = a_dst_bd.at[h, h * f_hid:(h + 1) * f_hid].set(a[f_hid:, 0])

    w_out, a_out = params["out"]
    n_class = w_out.shape[1]
    c_pad = ((n_class + 127) // 128) * 128                                 # lane-dense output
    w_out_pad = jnp.pad(w_out, ((0, 0), (0, c_pad - n_class)))
    a_out_pad = jnp.pad(a_out.reshape(2, n_class), ((0, 0), (0, c_pad - n_class)))

    # int8 adjacency: 4x less HBM->VMEM traffic for the largest per-graph operand.
    adj_i8 = (adj > 0).astype(jnp.int8)

    kernel = functools.partial(gat_fused_kernel, alpha=alpha, n_heads=n_heads,
                               f_hid=f_hid, n_class=n_class)

    flops_g = (2 * N * f_in * hf                       # x @ W_all
               + 2 * N * hf * n_heads * 2              # batched logit projections
               + n_heads * 2 * N * N * f_hid           # per-head p @ hh
               + 2 * N * hf * c_pad                    # slab @ W_out
               + 4 * N * c_pad                         # out-layer logit projections
               + 2 * N * N * c_pad)                    # out-layer p @ h_out
    trans_g = (n_heads + 1) * N * N + (n_heads + 2) * N * c_pad
    bytes_g = 4 * (N * f_in + N * c_pad) + N * N
    weight_bytes = 4 * (f_in * hf + hf * n_heads + n_heads * hf + hf * c_pad + 2 * c_pad)
    cost = pl.CostEstimate(flops=int(G * flops_g),
                           transcendentals=int(G * trans_g),
                           bytes_accessed=int(G * bytes_g + weight_bytes))

    out = pl.pallas_call(
        kernel,
        out_shape=jax.ShapeDtypeStruct((G, N, c_pad), jnp.float32),
        grid=(G,),
        in_specs=[
            pl.BlockSpec((None, N, f_in), lambda g: (g, 0, 0)),     # x
            pl.BlockSpec((None, N, N), lambda g: (g, 0, 0)),        # adj (int8)
            pl.BlockSpec((f_in, hf), lambda g: (0, 0)),             # W_all
            pl.BlockSpec((hf, n_heads), lambda g: (0, 0)),          # a_src block-diag
            pl.BlockSpec((n_heads, hf), lambda g: (0, 0)),          # a_dst block-diag
            pl.BlockSpec((hf, c_pad), lambda g: (0, 0)),            # W_out (padded)
            pl.BlockSpec((2, c_pad), lambda g: (0, 0)),             # a_out (padded)
        ],
        out_specs=pl.BlockSpec((None, N, c_pad), lambda g: (g, 0, 0)),
        scratch_shapes=[pltpu.VMEM((N, hf), jnp.float32)],          # heads slab
        compiler_params=pltpu.CompilerParams(
            dimension_semantics=("parallel",),
            vmem_limit_bytes=48 * 1024 * 1024),
        cost_estimate=cost,
    )(x, adj_i8, w_all, a_src_bd, a_dst_bd, w_out_pad, a_out_pad)

    out = out[:, :, :n_class]
    return out[0] if single else out


# ------------------------------- params init --------------------------------


def xavier_uniform(key, shape, gain):
    # torch.nn.init.xavier_uniform_ for 2-D: fan_in = shape[1], fan_out = shape[0]
    fan_in, fan_out = shape[1], shape[0]
    bound = gain * jnp.sqrt(6.0 / (fan_in + fan_out))
    return jax.random.uniform(key, shape, jnp.float32, -bound, bound)


def init_gat_params(key, n_feat, n_hid, n_class, n_heads, gain=1.414):
    params = {"heads": [], "out": None}
    keys = jax.random.split(key, 2 * n_heads + 2)
    for h in range(n_heads):
        W = xavier_uniform(keys[2 * h], (n_feat, n_hid), gain)
        a = xavier_uniform(keys[2 * h + 1], (2 * n_hid, 1), gain)
        params["heads"].append((W, a))
    W_out = xavier_uniform(keys[-2], (n_hid * n_heads, n_class), gain)
    a_out = xavier_uniform(keys[-1], (2 * n_class, 1), gain)
    params["out"] = (W_out, a_out)
    return params


# --------------------------------- driver -----------------------------------


if __name__ == "__main__":
    G = 4           # batch of graphs sharing one pallas_call (amortizes launch)
    N = 16          # nodes per graph
    n_feat = 12
    n_hid = 8
    n_class = 7
    n_heads = 3
    alpha = 0.2
    dropout = 0.6   # eval mode -> unused

    key = jax.random.PRNGKey(0)
    k_params, k_x, k_adj = jax.random.split(key, 3)

    params = init_gat_params(k_params, n_feat, n_hid, n_class, n_heads)

    x = jax.random.normal(k_x, (G, N, n_feat), dtype=jnp.float32)
    # random binary adjacency with self loops
    adj = (jax.random.uniform(k_adj, (G, N, N)) > 0.6).astype(jnp.float32)
    adj = jnp.maximum(adj, jnp.eye(N, dtype=jnp.float32)[None])

    out = gat_forward(params, x, adj, alpha=alpha)
    out = jax.block_until_ready(out)

    assert out.shape == (G, N, n_class)
    assert jnp.all(jnp.isfinite(out))

    # also exercise the single-graph path of the wrapper
    out1 = jax.block_until_ready(gat_forward(params, x[0], adj[0], alpha=alpha))
    assert out1.shape == (N, n_class)
    assert jnp.all(jnp.isfinite(out1))

    print("KERNEL_OK")
</pallas_src>

<mosaic_0001>
module attributes {stable_mosaic.version = 11 : i64} {
  func.func @gat_fused_kernel(%arg0: i32, %arg1: memref<1x16x12xf32, #tpu.memory_space<vmem>>, %arg2: memref<1x16x16xi8, #tpu.memory_space<vmem>>, %arg3: memref<12x24xf32, #tpu.memory_space<vmem>>, %arg4: memref<24x3xf32, #tpu.memory_space<vmem>>, %arg5: memref<3x24xf32, #tpu.memory_space<vmem>>, %arg6: memref<24x128xf32, #tpu.memory_space<vmem>>, %arg7: memref<2x128xf32, #tpu.memory_space<vmem>>, %arg8: memref<1x16x128xf32, #tpu.memory_space<vmem>>, %arg9: memref<16x24xf32, #tpu.memory_space<vmem>>) attributes {dimension_semantics = [#tpu.dimension_semantics<parallel>], iteration_bounds = array<i64: 4>, scalar_prefetch = 0 : i64, scratch_operands = 1 : i64, tpu.core_type = #tpu.core_type<tc>, window_params = [{transform_indices = @transform_0, window_bounds = array<i64: 1, 16, 12>}, {transform_indices = @transform_1, window_bounds = array<i64: 1, 16, 16>}, {pipeline_mode = #tpu.pipeline_mode<synchronous>, transform_indices = @transform_2, window_bounds = array<i64: 12, 24>}, {pipeline_mode = #tpu.pipeline_mode<synchronous>, transform_indices = @transform_3, window_bounds = array<i64: 24, 3>}, {pipeline_mode = #tpu.pipeline_mode<synchronous>, transform_indices = @transform_4, window_bounds = array<i64: 3, 24>}, {pipeline_mode = #tpu.pipeline_mode<synchronous>, transform_indices = @transform_5, window_bounds = array<i64: 24, 128>}, {pipeline_mode = #tpu.pipeline_mode<synchronous>, transform_indices = @transform_6, window_bounds = array<i64: 2, 128>}, {transform_indices = @transform_7, window_bounds = array<i64: 1, 16, 128>}]} {
    %c0 = arith.constant 0 : index
    %c0_0 = arith.constant 0 : index
    %c0_1 = arith.constant 0 : index
    %0 = vector.load %arg1[%c0, %c0_0, %c0_1] : memref<1x16x12xf32, #tpu.memory_space<vmem>>, vector<1x16x12xf32>
    %1 = vector.shape_cast %0 : vector<1x16x12xf32> to vector<16x12xf32>
    %c0_2 = arith.constant 0 : index
    %c0_3 = arith.constant 0 : index
    %c0_4 = arith.constant 0 : index
    %2 = vector.load %arg2[%c0_2, %c0_3, %c0_4] : memref<1x16x16xi8, #tpu.memory_space<vmem>>, vector<1x16x16xi8>
    %3 = vector.shape_cast %2 : vector<1x16x16xi8> to vector<16x16xi8>
    %4 = arith.extsi %3 : vector<16x16xi8> to vector<16x16xi32>
    %c0_i32 = arith.constant 0 : i32
    %5 = vector.broadcast %c0_i32 : i32 to vector<16x16xi32>
    %6 = arith.cmpi sgt, %4, %5 : vector<16x16xi32>
    %c0_5 = arith.constant 0 : index
    %c0_6 = arith.constant 0 : index
    %7 = vector.load %arg3[%c0_5, %c0_6] : memref<12x24xf32, #tpu.memory_space<vmem>>, vector<12x24xf32>
    %cst = arith.constant dense<0.000000e+00> : vector<16x24xf32>
    %8 = tpu.matmul %1, %7, %cst {dimension_numbers = #tpu.dot_dimension_numbers<[1], [0], [0], [1], [0, 0, 1, 1], [], []>} : vector<16x12xf32>, vector<12x24xf32>, vector<16x24xf32> -> vector<16x24xf32>
    %c0_7 = arith.constant 0 : index
    %c0_8 = arith.constant 0 : index
    %9 = vector.load %arg4[%c0_7, %c0_8] : memref<24x3xf32, #tpu.memory_space<vmem>>, vector<24x3xf32>
    %cst_9 = arith.constant dense<0.000000e+00> : vector<16x3xf32>
    %10 = tpu.matmul %8, %9, %cst_9 {dimension_numbers = #tpu.dot_dimension_numbers<[1], [0], [0], [1], [0, 0, 1, 1], [], []>} : vector<16x24xf32>, vector<24x3xf32>, vector<16x3xf32> -> vector<16x3xf32>
    %c0_10 = arith.constant 0 : index
    %c0_11 = arith.constant 0 : index
    %11 = vector.load %arg5[%c0_10, %c0_11] : memref<3x24xf32, #tpu.memory_space<vmem>>, vector<3x24xf32>
    %cst_12 = arith.constant dense<0.000000e+00> : vector<3x16xf32>
    %12 = tpu.matmul %11, %8, %cst_12 {dimension_numbers = #tpu.dot_dimension_numbers<[1], [1], [0], [0], [0, 0, 1, 0], [], []>} : vector<3x24xf32>, vector<16x24xf32>, vector<3x16xf32> -> vector<3x16xf32>
    %13 = vector.extract_strided_slice %8 {offsets = [0, 0], sizes = [16, 8], strides = [1, 1]} : vector<16x24xf32> to vector<16x8xf32>
    %14 = vector.extract_strided_slice %10 {offsets = [0, 0], sizes = [16, 1], strides = [1, 1]} : vector<16x3xf32> to vector<16x1xf32>
    %15 = vector.extract_strided_slice %12 {offsets = [0, 0], sizes = [1, 16], strides = [1, 1]} : vector<3x16xf32> to vector<1x16xf32>
    %16 = vector.broadcast %14 : vector<16x1xf32> to vector<16x16xf32>
    %17 = vector.broadcast %15 : vector<1x16xf32> to vector<16x16xf32>
    %18 = arith.addf %16, %17 : vector<16x16xf32>
    %cst_13 = arith.constant 0.000000e+00 : f32
    %19 = vector.broadcast %cst_13 : f32 to vector<16x16xf32>
    %20 = arith.cmpf ogt, %18, %19 : vector<16x16xf32>
    %cst_14 = arith.constant 2.000000e-01 : f32
    %21 = vector.broadcast %cst_14 : f32 to vector<16x16xf32>
    %22 = arith.mulf %21, %18 : vector<16x16xf32>
    %23 = arith.select %20, %18, %22 : vector<16x16xi1>, vector<16x16xf32>
    %cst_15 = arith.constant -9.99999995E+11 : f32
    %24 = vector.broadcast %cst_15 : f32 to vector<16x16xf32>
    %25 = arith.select %6, %23, %24 : vector<16x16xi1>, vector<16x16xf32>
    %cst_16 = arith.constant dense<0xFF800000> : vector<16xf32>
    %26 = vector.multi_reduction <maximumf>, %25, %cst_16 [1] : vector<16x16xf32> to vector<16xf32>
    %27 = vector.shape_cast %26 : vector<16xf32> to vector<16x1xf32>
    %28 = vector.broadcast %27 : vector<16x1xf32> to vector<16x16xf32>
    %29 = arith.subf %25, %28 : vector<16x16xf32>
    %30 = math.exp %29 : vector<16x16xf32>
    %cst_17 = arith.constant dense<0.000000e+00> : vector<16xf32>
    %31 = vector.multi_reduction <add>, %30, %cst_17 [1] : vector<16x16xf32> to vector<16xf32>
    %32 = vector.shape_cast %31 : vector<16xf32> to vector<16x1xf32>
    %cst_18 = arith.constant dense<0.000000e+00> : vector<16x8xf32>
    %33 = tpu.matmul %30, %13, %cst_18 {dimension_numbers = #tpu.dot_dimension_numbers<[1], [0], [0], [1], [0, 0, 1, 1], [], []>} : vector<16x16xf32>, vector<16x8xf32>, vector<16x8xf32> -> vector<16x8xf32>
    %34 = tpu.reciprocal %32 : vector<16x1xf32> -> vector<16x1xf32>
    %35 = vector.broadcast %34 : vector<16x1xf32> to vector<16x8xf32>
    %36 = arith.mulf %33, %35 : vector<16x8xf32>
    %cst_19 = arith.constant 0.000000e+00 : f32
    %37 = vector.broadcast %cst_19 : f32 to vector<16x8xf32>
    %38 = arith.cmpf ogt, %36, %37 : vector<16x8xf32>
    %cst_20 = arith.constant 0.000000e+00 : f32
    %39 = vector.broadcast %cst_20 : f32 to vector<16x8xf32>
    %40 = arith.minimumf %36, %39 : vector<16x8xf32>
    %41 = math.exp %40 : vector<16x8xf32>
    %cst_21 = arith.constant 1.000000e+00 : f32
    %42 = vector.broadcast %cst_21 : f32 to vector<16x8xf32>
    %43 = arith.subf %41, %42 : vector<16x8xf32>
    %44 = arith.select %38, %36, %43 : vector<16x8xi1>, vector<16x8xf32>
    %c0_22 = arith.constant 0 : index
    %c0_23 = arith.constant 0 : index
    %45 = vector.load %arg9[%c0_22, %c0_23] : memref<16x24xf32, #tpu.memory_space<vmem>>, vector<16x8xf32>
    tpu.vector_store %arg9[%c0_22, %c0_23], %44 {strides = array<i32>} : memref<16x24xf32, #tpu.memory_space<vmem>>, vector<16x8xf32>,
    %46 = vector.extract_strided_slice %8 {offsets = [0, 8], sizes = [16, 8], strides = [1, 1]} : vector<16x24xf32> to vector<16x8xf32>
    %47 = vector.extract_strided_slice %10 {offsets = [0, 1], sizes = [16, 1], strides = [1, 1]} : vector<16x3xf32> to vector<16x1xf32>
    %48 = vector.extract_strided_slice %12 {offsets = [1, 0], sizes = [1, 16], strides = [1, 1]} : vector<3x16xf32> to vector<1x16xf32>
    %49 = vector.broadcast %47 : vector<16x1xf32> to vector<16x16xf32>
    %50 = vector.broadcast %48 : vector<1x16xf32> to vector<16x16xf32>
    %51 = arith.addf %49, %50 : vector<16x16xf32>
    %cst_24 = arith.constant 0.000000e+00 : f32
    %52 = vector.broadcast %cst_24 : f32 to vector<16x16xf32>
    %53 = arith.cmpf ogt, %51, %52 : vector<16x16xf32>
    %cst_25 = arith.constant 2.000000e-01 : f32
    %54 = vector.broadcast %cst_25 : f32 to vector<16x16xf32>
    %55 = arith.mulf %54, %51 : vector<16x16xf32>
    %56 = arith.select %53, %51, %55 : vector<16x16xi1>, vector<16x16xf32>
    %cst_26 = arith.constant -9.99999995E+11 : f32
    %57 = vector.broadcast %cst_26 : f32 to vector<16x16xf32>
    %58 = arith.select %6, %56, %57 : vector<16x16xi1>, vector<16x16xf32>
    %cst_27 = arith.constant dense<0xFF800000> : vector<16xf32>
    %59 = vector.multi_reduction <maximumf>, %58, %cst_27 [1] : vector<16x16xf32> to vector<16xf32>
    %60 = vector.shape_cast %59 : vector<16xf32> to vector<16x1xf32>
    %61 = vector.broadcast %60 : vector<16x1xf32> to vector<16x16xf32>
    %62 = arith.subf %58, %61 : vector<16x16xf32>
    %63 = math.exp %62 : vector<16x16xf32>
    %cst_28 = arith.constant dense<0.000000e+00> : vector<16xf32>
    %64 = vector.multi_reduction <add>, %63, %cst_28 [1] : vector<16x16xf32> to vector<16xf32>
    %65 = vector.shape_cast %64 : vector<16xf32> to vector<16x1xf32>
    %cst_29 = arith.constant dense<0.000000e+00> : vector<16x8xf32>
    %66 = tpu.matmul %63, %46, %cst_29 {dimension_numbers = #tpu.dot_dimension_numbers<[1], [0], [0], [1], [0, 0, 1, 1], [], []>} : vector<16x16xf32>, vector<16x8xf32>, vector<16x8xf32> -> vector<16x8xf32>
    %67 = tpu.reciprocal %65 : vector<16x1xf32> -> vector<16x1xf32>
    %68 = vector.broadcast %67 : vector<16x1xf32> to vector<16x8xf32>
    %69 = arith.mulf %66, %68 : vector<16x8xf32>
    %cst_30 = arith.constant 0.000000e+00 : f32
    %70 = vector.broadcast %cst_30 : f32 to vector<16x8xf32>
    %71 = arith.cmpf ogt, %69, %70 : vector<16x8xf32>
    %cst_31 = arith.constant 0.000000e+00 : f32
    %72 = vector.broadcast %cst_31 : f32 to vector<16x8xf32>
    %73 = arith.minimumf %69, %72 : vector<16x8xf32>
    %74 = math.exp %73 : vector<16x8xf32>
    %cst_32 = arith.constant 1.000000e+00 : f32
    %75 = vector.broadcast %cst_32 : f32 to vector<16x8xf32>
    %76 = arith.subf %74, %75 : vector<16x8xf32>
    %77 = arith.select %71, %69, %76 : vector<16x8xi1>, vector<16x8xf32>
    %c0_33 = arith.constant 0 : index
    %c8 = arith.constant 8 : index
    %78 = vector.load %arg9[%c0_33, %c8] : memref<16x24xf32, #tpu.memory_space<vmem>>, vector<16x8xf32>
    tpu.vector_store %arg9[%c0_33, %c8], %77 {strides = array<i32>} : memref<16x24xf32, #tpu.memory_space<vmem>>, vector<16x8xf32>,
    %79 = vector.extract_strided_slice %8 {offsets = [0, 16], sizes = [16, 8], strides = [1, 1]} : vector<16x24xf32> to vector<16x8xf32>
    %80 = vector.extract_strided_slice %10 {offsets = [0, 2], sizes = [16, 1], strides = [1, 1]} : vector<16x3xf32> to vector<16x1xf32>
    %81 = vector.extract_strided_slice %12 {offsets = [2, 0], sizes = [1, 16], strides = [1, 1]} : vector<3x16xf32> to vector<1x16xf32>
    %82 = vector.broadcast %80 : vector<16x1xf32> to vector<16x16xf32>
    %83 = vector.broadcast %81 : vector<1x16xf32> to vector<16x16xf32>
    %84 = arith.addf %82, %83 : vector<16x16xf32>
    %cst_34 = arith.constant 0.000000e+00 : f32
    %85 = vector.broadcast %cst_34 : f32 to vector<16x16xf32>
    %86 = arith.cmpf ogt, %84, %85 : vector<16x16xf32>
    %cst_35 = arith.constant 2.000000e-01 : f32
    %87 = vector.broadcast %cst_35 : f32 to vector<16x16xf32>
    %88 = arith.mulf %87, %84 : vector<16x16xf32>
    %89 = arith.select %86, %84, %88 : vector<16x16xi1>, vector<16x16xf32>
    %cst_36 = arith.constant -9.99999995E+11 : f32
    %90 = vector.broadcast %cst_36 : f32 to vector<16x16xf32>
    %91 = arith.select %6, %89, %90 : vector<16x16xi1>, vector<16x16xf32>
    %cst_37 = arith.constant dense<0xFF800000> : vector<16xf32>
    %92 = vector.multi_reduction <maximumf>, %91, %cst_37 [1] : vector<16x16xf32> to vector<16xf32>
    %93 = vector.shape_cast %92 : vector<16xf32> to vector<16x1xf32>
    %94 = vector.broadcast %93 : vector<16x1xf32> to vector<16x16xf32>
    %95 = arith.subf %91, %94 : vector<16x16xf32>
    %96 = math.exp %95 : vector<16x16xf32>
    %cst_38 = arith.constant dense<0.000000e+00> : vector<16xf32>
    %97 = vector.multi_reduction <add>, %96, %cst_38 [1] : vector<16x16xf32> to vector<16xf32>
    %98 = vector.shape_cast %97 : vector<16xf32> to vector<16x1xf32>
    %cst_39 = arith.constant dense<0.000000e+00> : vector<16x8xf32>
    %99 = tpu.matmul %96, %79, %cst_39 {dimension_numbers = #tpu.dot_dimension_numbers<[1], [0], [0], [1], [0, 0, 1, 1], [], []>} : vector<16x16xf32>, vector<16x8xf32>, vector<16x8xf32> -> vector<16x8xf32>
    %100 = tpu.reciprocal %98 : vector<16x1xf32> -> vector<16x1xf32>
    %101 = vector.broadcast %100 : vector<16x1xf32> to vector<16x8xf32>
    %102 = arith.mulf %99, %101 : vector<16x8xf32>
    %cst_40 = arith.constant 0.000000e+00 : f32
    %103 = vector.broadcast %cst_40 : f32 to vector<16x8xf32>
    %104 = arith.cmpf ogt, %102, %103 : vector<16x8xf32>
    %cst_41 = arith.constant 0.000000e+00 : f32
    %105 = vector.broadcast %cst_41 : f32 to vector<16x8xf32>
    %106 = arith.minimumf %102, %105 : vector<16x8xf32>
    %107 = math.exp %106 : vector<16x8xf32>
    %cst_42 = arith.constant 1.000000e+00 : f32
    %108 = vector.broadcast %cst_42 : f32 to vector<16x8xf32>
    %109 = arith.subf %107, %108 : vector<16x8xf32>
    %110 = arith.select %104, %102, %109 : vector<16x8xi1>, vector<16x8xf32>
    %c0_43 = arith.constant 0 : index
    %c16 = arith.constant 16 : index
    %111 = vector.load %arg9[%c0_43, %c16] : memref<16x24xf32, #tpu.memory_space<vmem>>, vector<16x8xf32>
    tpu.vector_store %arg9[%c0_43, %c16], %110 {strides = array<i32>} : memref<16x24xf32, #tpu.memory_space<vmem>>, vector<16x8xf32>,
    %c0_44 = arith.constant 0 : index
    %c0_45 = arith.constant 0 : index
    %112 = vector.load %arg9[%c0_44, %c0_45] : memref<16x24xf32, #tpu.memory_space<vmem>>, vector<16x24xf32>
    %c0_46 = arith.constant 0 : index
    %c0_47 = arith.constant 0 : index
    %113 = vector.load %arg6[%c0_46, %c0_47] : memref<24x128xf32, #tpu.memory_space<vmem>>, vector<24x128xf32>
    %cst_48 = arith.constant dense<0.000000e+00> : vector<16x128xf32>
    %114 = tpu.matmul %112, %113, %cst_48 {dimension_numbers = #tpu.dot_dimension_numbers<[1], [0], [0], [1], [0, 0, 1, 1], [], []>} : vector<16x24xf32>, vector<24x128xf32>, vector<16x128xf32> -> vector<16x128xf32>
    %c0_49 = arith.constant 0 : index
    %c0_50 = arith.constant 0 : index
    %115 = vector.load %arg7[%c0_49, %c0_50] : memref<2x128xf32, #tpu.memory_space<vmem>>, vector<2x128xf32>
    %116 = vector.extract_strided_slice %115 {offsets = [0, 0], sizes = [1, 128], strides = [1, 1]} : vector<2x128xf32> to vector<1x128xf32>
    %cst_51 = arith.constant dense<0.000000e+00> : vector<16x1xf32>
    %117 = tpu.matmul %114, %116, %cst_51 {dimension_numbers = #tpu.dot_dimension_numbers<[1], [1], [0], [0], [0, 0, 1, 0], [], []>} : vector<16x128xf32>, vector<1x128xf32>, vector<16x1xf32> -> vector<16x1xf32>
    %118 = vector.extract_strided_slice %115 {offsets = [1, 0], sizes = [1, 128], strides = [1, 1]} : vector<2x128xf32> to vector<1x128xf32>
    %cst_52 = arith.constant dense<0.000000e+00> : vector<1x16xf32>
    %119 = tpu.matmul %118, %114, %cst_52 {dimension_numbers = #tpu.dot_dimension_numbers<[1], [1], [0], [0], [0, 0, 1, 0], [], []>} : vector<1x128xf32>, vector<16x128xf32>, vector<1x16xf32> -> vector<1x16xf32>
    %120 = vector.broadcast %117 : vector<16x1xf32> to vector<16x16xf32>
    %121 = vector.broadcast %119 : vector<1x16xf32> to vector<16x16xf32>
    %122 = arith.addf %120, %121 : vector<16x16xf32>
    %cst_53 = arith.constant 0.000000e+00 : f32
    %123 = vector.broadcast %cst_53 : f32 to vector<16x16xf32>
    %124 = arith.cmpf ogt, %122, %123 : vector<16x16xf32>
    %cst_54 = arith.constant 2.000000e-01 : f32
    %125 = vector.broadcast %cst_54 : f32 to vector<16x16xf32>
    %126 = arith.mulf %125, %122 : vector<16x16xf32>
    %127 = arith.select %124, %122, %126 : vector<16x16xi1>, vector<16x16xf32>
    %cst_55 = arith.constant -9.99999995E+11 : f32
    %128 = vector.broadcast %cst_55 : f32 to vector<16x16xf32>
    %129 = arith.select %6, %127, %128 : vector<16x16xi1>, vector<16x16xf32>
    %cst_56 = arith.constant dense<0xFF800000> : vector<16xf32>
    %130 = vector.multi_reduction <maximumf>, %129, %cst_56 [1] : vector<16x16xf32> to vector<16xf32>
    %131 = vector.shape_cast %130 : vector<16xf32> to vector<16x1xf32>
    %132 = vector.broadcast %131 : vector<16x1xf32> to vector<16x16xf32>
    %133 = arith.subf %129, %132 : vector<16x16xf32>
    %134 = math.exp %133 : vector<16x16xf32>
    %cst_57 = arith.constant dense<0.000000e+00> : vector<16xf32>
    %135 = vector.multi_reduction <add>, %134, %cst_57 [1] : vector<16x16xf32> to vector<16xf32>
    %136 = vector.shape_cast %135 : vector<16xf32> to vector<16x1xf32>
    %cst_58 = arith.constant dense<0.000000e+00> : vector<16x128xf32>
    %137 = tpu.matmul %134, %114, %cst_58 {dimension_numbers = #tpu.dot_dimension_numbers<[1], [0], [0], [1], [0, 0, 1, 1], [], []>} : vector<16x16xf32>, vector<16x128xf32>, vector<16x128xf32> -> vector<16x128xf32>
    %138 = tpu.reciprocal %136 : vector<16x1xf32> -> vector<16x1xf32>
    %139 = vector.broadcast %138 : vector<16x1xf32> to vector<16x128xf32>
    %140 = arith.mulf %137, %139 : vector<16x128xf32>
    %cst_59 = arith.constant 0.000000e+00 : f32
    %141 = vector.broadcast %cst_59 : f32 to vector<16x128xf32>
    %142 = arith.cmpf ogt, %140, %141 : vector<16x128xf32>
    %cst_60 = arith.constant 0.000000e+00 : f32
    %143 = vector.broadcast %cst_60 : f32 to vector<16x128xf32>
    %144 = arith.minimumf %140, %143 : vector<16x128xf32>
    %145 = math.exp %144 : vector<16x128xf32>
    %cst_61 = arith.constant 1.000000e+00 : f32
    %146 = vector.broadcast %cst_61 : f32 to vector<16x128xf32>
    %147 = arith.subf %145, %146 : vector<16x128xf32>
    %148 = arith.select %142, %140, %147 : vector<16x128xi1>, vector<16x128xf32>
    %149 = tpu.iota {dimensions = array<i32: 1>} : vector<16x128xi32>
    %c7_i32 = arith.constant 7 : i32
    %150 = vector.broadcast %c7_i32 : i32 to vector<16x128xi32>
    %151 = arith.cmpi slt, %149, %150 : vector<16x128xi32>
    %cst_62 = arith.constant -9.99999995E+11 : f32
    %152 = vector.broadcast %cst_62 : f32 to vector<16x128xf32>
    %153 = arith.select %151, %148, %152 : vector<16x128xi1>, vector<16x128xf32>
    %cst_63 = arith.constant dense<0xFF800000> : vector<16xf32>
    %154 = vector.multi_reduction <maximumf>, %153, %cst_63 [1] : vector<16x128xf32> to vector<16xf32>
    %155 = vector.shape_cast %154 : vector<16xf32> to vector<16x1xf32>
    %156 = vector.broadcast %155 : vector<16x1xf32> to vector<16x128xf32>
    %157 = arith.subf %153, %156 : vector<16x128xf32>
    %158 = math.exp %157 : vector<16x128xf32>
    %cst_64 = arith.constant 0.000000e+00 : f32
    %159 = vector.broadcast %cst_64 : f32 to vector<16x128xf32>
    %160 = arith.select %151, %158, %159 : vector<16x128xi1>, vector<16x128xf32>
    %cst_65 = arith.constant dense<0.000000e+00> : vector<16xf32>
    %161 = vector.multi_reduction <add>, %160, %cst_65 [1] : vector<16x128xf32> to vector<16xf32>
    %162 = vector.shape_cast %161 : vector<16xf32> to vector<16x1xf32>
    %163 = math.log %162 : vector<16x1xf32>
    %164 = arith.addf %163, %155 : vector<16x1xf32>
    %165 = vector.broadcast %164 : vector<16x1xf32> to vector<16x128xf32>
    %166 = arith.subf %148, %165 : vector<16x128xf32>
    %c0_66 = arith.constant 0 : index
    %c0_67 = arith.constant 0 : index
    %c0_68 = arith.constant 0 : index
    %167 = vector.load %arg8[%c0_66, %c0_67, %c0_68] : memref<1x16x128xf32, #tpu.memory_space<vmem>>, vector<1x16x128xf32>
    %168 = vector.shape_cast %167 : vector<1x16x128xf32> to vector<16x128xf32>
    %169 = vector.shape_cast %166 : vector<16x128xf32> to vector<1x16x128xf32>
    tpu.vector_store %arg8[%c0_66, %c0_67, %c0_68], %169 {strides = array<i32>} : memref<1x16x128xf32, #tpu.memory_space<vmem>>, vector<1x16x128xf32>,
    return
  }
  func.func @transform_0(%arg0: i32) -> (i32, i32, i32) {
    %c0_i32 = arith.constant 0 : i32
    %c0_i32_0 = arith.constant 0 : i32
    %c0_i32_1 = arith.constant 0 : i32
    return %arg0, %c0_i32, %c0_i32_0 : i32, i32, i32
  }
  func.func @transform_1(%arg0: i32) -> (i32, i32, i32) {
    %c0_i32 = arith.constant 0 : i32
    %c0_i32_0 = arith.constant 0 : i32
    %c0_i32_1 = arith.constant 0 : i32
    return %arg0, %c0_i32, %c0_i32_0 : i32, i32, i32
  }
  func.func @transform_2(%arg0: i32) -> (i32, i32) {
    %c0_i32 = arith.constant 0 : i32
    %c0_i32_0 = arith.constant 0 : i32
    %c0_i32_1 = arith.constant 0 : i32
    return %c0_i32, %c0_i32_0 : i32, i32
  }
  func.func @transform_3(%arg0: i32) -> (i32, i32) {
    %c0_i32 = arith.constant 0 : i32
    %c0_i32_0 = arith.constant 0 : i32
    %c0_i32_1 = arith.constant 0 : i32
    return %c0_i32, %c0_i32_0 : i32, i32
  }
  func.func @transform_4(%arg0: i32) -> (i32, i32) {
    %c0_i32 = arith.constant 0 : i32
    %c0_i32_0 = arith.constant 0 : i32
    %c0_i32_1 = arith.constant 0 : i32
    return %c0_i32, %c0_i32_0 : i32, i32
  }
  func.func @transform_5(%arg0: i32) -> (i32, i32) {
    %c0_i32 = arith.constant 0 : i32
    %c0_i32_0 = arith.constant 0 : i32
    %c0_i32_1 = arith.constant 0 : i32
    return %c0_i32, %c0_i32_0 : i32, i32
  }
  func.func @transform_6(%arg0: i32) -> (i32, i32) {
    %c0_i32 = arith.constant 0 : i32
    %c0_i32_0 = arith.constant 0 : i32
    %c0_i32_1 = arith.constant 0 : i32
    return %c0_i32, %c0_i32_0 : i32, i32
  }
  func.func @transform_7(%arg0: i32) -> (i32, i32, i32) {
    %c0_i32 = arith.constant 0 : i32
    %c0_i32_0 = arith.constant 0 : i32
    %c0_i32_1 = arith.constant 0 : i32
    return %arg0, %c0_i32, %c0_i32_0 : i32, i32, i32
  }
}

</mosaic_0001>

<llo_original>
// kernel: tpu_custom_call.1
$region0: #{tpu_custom_call.1}
  #allocation0 [shape = 'u32[]', space=smem, size = 0x4, offset = 0x4, fixed_abs, tag = 'smem constant byte address 0x4 - core index']
  #allocation1 [shape = 'u32[144,128]{1,0:T(1,128)}', space=vmem, size = 0x12000, scoped, tag = 'internal scratch']
  #allocation2 [shape = 'f32[16,24]{1,0:T(8,128)}', space=vmem, size = 0x2000, scoped, tag = 'scratch operand']
  %s0 = inlined_call_operand.vmem [shape: f32[4,16,12], index: 0, kind: input, shape index: {}]
  %s1 = inlined_call_operand.vmem [shape: s8[4,16,16], index: 1, kind: input, shape index: {}]
  %s2 = inlined_call_operand.vmem [shape: f32[12,24], index: 2, kind: input, shape index: {}]
  %s3 = inlined_call_operand.vmem [shape: f32[24,3], index: 3, kind: input, shape index: {}]
  %s4 = inlined_call_operand.vmem [shape: f32[3,24], index: 4, kind: input, shape index: {}]
  %s5 = inlined_call_operand.vmem [shape: f32[24,128], index: 5, kind: input, shape index: {}]
  %s6 = inlined_call_operand.vmem [shape: f32[2,128], index: 6, kind: input, shape index: {}]
  %s7 = inlined_call_operand.hbm [shape: f32[4,16,128], index: 7, kind: output, shape index: {}]
  %s8 = sld [smem:[#allocation0]]
  $region61: #{tpu_custom_call.1} parent=0
    _
  %s10 = ssub.s32 1, %s8
  %s11 = scalar_select 0, %s10, %s8
  $region1: #{tpu_custom_call.1} parent=0
    #allocation3 [shape = 'u8[16384]{0}', space=vmem, size = 0x4000, scoped, tag = 'output window, operand 0']
    #allocation4 [shape = 's32[2]{0}', space=sflag, size = 0x8, scoped, tag = 'scoped memory for tpu_custom_call.1']
    %12 = vsyncpa [#allocation4], 0
    %s13 = scalar_lea.sflag [#allocation4], 1
    %14 = vsyncpa %s13, 0
    loop: start=0, step=1, limit=6
    $region2: #{tpu_custom_call.1} parent=1 // loop_pre_header
      _
    $region3: #{tpu_custom_call.1} parent=1 // loop_header
      %s16 = sphi 0, %s20
      %p17 = scmp.ge.s32.totalorder %s16, 6
      %s26 = sphi 0, %s28
      %s29 = sphi 0, %s26
      %s30 = sphi 0, %s29
      %s46 = sphi 0, %s30
      %s52 = sphi 0, %s54
      %s55 = sphi 0, %s52
      %s56 = sphi 0, %s55
      %s72 = sphi 0, %s56
      %s76 = sphi 0, %s76
      %s78 = sphi 0, %s76
      %s79 = sphi 0, %s78
      %s93 = sphi 0, %s79
      %s97 = sphi 0, %s97
      %s99 = sphi 0, %s97
      %s100 = sphi 0, %s99
      %s114 = sphi 0, %s100
      %s118 = sphi 0, %s118
      %s120 = sphi 0, %s118
      %s121 = sphi 0, %s120
      %s135 = sphi 0, %s121
      %s139 = sphi 0, %s139
      %s141 = sphi 0, %s139
      %s142 = sphi 0, %s141
      %s156 = sphi 0, %s142
      %s160 = sphi 0, %s160
      %s162 = sphi 0, %s160
      %s163 = sphi 0, %s162
      %s177 = sphi 0, %s163
      %s183 = sphi 0, %s185
      %s186 = sphi 0, %s183
      %s187 = sphi 0, %s186
      %s203 = sphi 0, %s187
    $region4: #{tpu_custom_call.1} parent=1 // loop_header_branch
      %19 = sbr.rel (%p17) target = $region8
    $region5: #{tpu_custom_call.1} parent=1 // loop_body
      %s21 = ssub.s32 %s16, 1
      %s22 = ssub.s32 %s16, 2
      %s23 = sadd.s32 %s16, 1
      %s24 = ssub.s32 %s16, %s23
      %p25 = scmp.eq.s32.totalorder %s24, 0
      %s27 = sadd.s32 %s26, 1
      %s28 = scalar_select %p25, %s26, %s27
      %p31 = pneg %p25
      %p32 = scmp.eq.s32.totalorder %s16, 3
      %p33 = por %p31, %p32
      %p34 = scmp.ne.s32.totalorder %s26, %s29
      %p35 = scmp.eq.s32.totalorder %s16, 0
      %p36 = por %p34, %p35
      %p37 = scmp.ne.s32.totalorder %s26, %s29
      %p38 = scmp.eq.s32.totalorder %s21, 3
      %p39 = por %p37, %p38
      %p40 = scmp.ne.s32.totalorder %s29, %s30
      %p41 = scmp.eq.s32.totalorder %s21, 0
      %p42 = por %p40, %p41
      %p43 = scmp.ne.s32.totalorder %s29, %s30
      %p44 = scmp.eq.s32.totalorder %s22, 3
      %p45 = por %p43, %p44
      %p47 = scmp.ne.s32.totalorder %s30, %s46
      %p48 = scmp.eq.s32.totalorder %s22, 0
      %p49 = por %p47, %p48
      %s50 = ssub.s32 %s16, %s23
      %p51 = scmp.eq.s32.totalorder %s50, 0
      %s53 = sadd.s32 %s52, 1
      %s54 = scalar_select %p51, %s52, %s53
      %p57 = pneg %p51
      %p58 = scmp.eq.s32.totalorder %s16, 3
      %p59 = por %p57, %p58
      %p60 = scmp.ne.s32.totalorder %s52, %s55
      %p61 = scmp.eq.s32.totalorder %s16, 0
      %p62 = por %p60, %p61
      %p63 = scmp.ne.s32.totalorder %s52, %s55
      %p64 = scmp.eq.s32.totalorder %s21, 3
      %p65 = por %p63, %p64
      %p66 = scmp.ne.s32.totalorder %s55, %s56
      %p67 = scmp.eq.s32.totalorder %s21, 0
      %p68 = por %p66, %p67
      %p69 = scmp.ne.s32.totalorder %s55, %s56
      %p70 = scmp.eq.s32.totalorder %s22, 3
      %p71 = por %p69, %p70
      %p73 = scmp.ne.s32.totalorder %s56, %s72
      %p74 = scmp.eq.s32.totalorder %s22, 0
      %p75 = por %p73, %p74
      %s77 = sadd.s32 %s76, 1
      %p80 = scmp.eq.s32.totalorder %s16, 3
      %p81 = scmp.ne.s32.totalorder %s76, %s78
      %p82 = scmp.eq.s32.totalorder %s16, 0
      %p83 = por %p81, %p82
      %p84 = scmp.ne.s32.totalorder %s76, %s78
      %p85 = scmp.eq.s32.totalorder %s21, 3
      %p86 = por %p84, %p85
      %p87 = scmp.ne.s32.totalorder %s78, %s79
      %p88 = scmp.eq.s32.totalorder %s21, 0
      %p89 = por %p87, %p88
      %p90 = scmp.ne.s32.totalorder %s78, %s79
      %p91 = scmp.eq.s32.totalorder %s22, 3
      %p92 = por %p90, %p91
      %p94 = scmp.ne.s32.totalorder %s79, %s93
      %p95 = scmp.eq.s32.totalorder %s22, 0
      %p96 = por %p94, %p95
      %s98 = sadd.s32 %s97, 1
      %p101 = scmp.eq.s32.totalorder %s16, 3
      %p102 = scmp.ne.s32.totalorder %s97, %s99
      %p103 = scmp.eq.s32.totalorder %s16, 0
      %p104 = por %p102, %p103
      %p105 = scmp.ne.s32.totalorder %s97, %s99
      %p106 = scmp.eq.s32.totalorder %s21, 3
      %p107 = por %p105, %p106
      %p108 = scmp.ne.s32.totalorder %s99, %s100
      %p109 = scmp.eq.s32.totalorder %s21, 0
      %p110 = por %p108, %p109
      %p111 = scmp.ne.s32.totalorder %s99, %s100
      %p112 = scmp.eq.s32.totalorder %s22, 3
      %p113 = por %p111, %p112
      %p115 = scmp.ne.s32.totalorder %s100, %s114
      %p116 = scmp.eq.s32.totalorder %s22, 0
      %p117 = por %p115, %p116
      %s119 = sadd.s32 %s118, 1
      %p122 = scmp.eq.s32.totalorder %s16, 3
      %p123 = scmp.ne.s32.totalorder %s118, %s120
      %p124 = scmp.eq.s32.totalorder %s16, 0
      %p125 = por %p123, %p124
      %p126 = scmp.ne.s32.totalorder %s118, %s120
      %p127 = scmp.eq.s32.totalorder %s21, 3
      %p128 = por %p126, %p127
      %p129 = scmp.ne.s32.totalorder %s120, %s121
      %p130 = scmp.eq.s32.totalorder %s21, 0
      %p131 = por %p129, %p130
      %p132 = scmp.ne.s32.totalorder %s120, %s121
      %p133 = scmp.eq.s32.totalorder %s22, 3
      %p134 = por %p132, %p133
      %p136 = scmp.ne.s32.totalorder %s121, %s135
      %p137 = scmp.eq.s32.totalorder %s22, 0
      %p138 = por %p136, %p137
      %s140 = sadd.s32 %s139, 1
      %p143 = scmp.eq.s32.totalorder %s16, 3
      %p144 = scmp.ne.s32.totalorder %s139, %s141
      %p145 = scmp.eq.s32.totalorder %s16, 0
      %p146 = por %p144, %p145
      %p147 = scmp.ne.s32.totalorder %s139, %s141
      %p148 = scmp.eq.s32.totalorder %s21, 3
      %p149 = por %p147, %p148
      %p150 = scmp.ne.s32.totalorder %s141, %s142
      %p151 = scmp.eq.s32.totalorder %s21, 0
      %p152 = por %p150, %p151
      %p153 = scmp.ne.s32.totalorder %s141, %s142
      %p154 = scmp.eq.s32.totalorder %s22, 3
      %p155 = por %p153, %p154
      %p157 = scmp.ne.s32.totalorder %s142, %s156
      %p158 = scmp.eq.s32.totalorder %s22, 0
      %p159 = por %p157, %p158
      %s161 = sadd.s32 %s160, 1
      %p164 = scmp.eq.s32.totalorder %s16, 3
      %p165 = scmp.ne.s32.totalorder %s160, %s162
      %p166 = scmp.eq.s32.totalorder %s16, 0
      %p167 = por %p165, %p166
      %p168 = scmp.ne.s32.totalorder %s160, %s162
      %p169 = scmp.eq.s32.totalorder %s21, 3
      %p170 = por %p168, %p169
      %p171 = scmp.ne.s32.totalorder %s162, %s163
      %p172 = scmp.eq.s32.totalorder %s21, 0
      %p173 = por %p171, %p172
      %p174 = scmp.ne.s32.totalorder %s162, %s163
      %p175 = scmp.eq.s32.totalorder %s22, 3
      %p176 = por %p174, %p175
      %p178 = scmp.ne.s32.totalorder %s163, %s177
      %p179 = scmp.eq.s32.totalorder %s22, 0
      %p180 = por %p178, %p179
      %s181 = ssub.s32 %s16, %s23
      %p182 = scmp.eq.s32.totalorder %s181, 0
      %s184 = sadd.s32 %s183, 1
      %s185 = scalar_select %p182, %s183, %s184
      %p188 = pneg %p182
      %p189 = scmp.eq.s32.totalorder %s16, 3
      %p190 = por %p188, %p189
      %p191 = scmp.ne.s32.totalorder %s183, %s186
      %p192 = scmp.eq.s32.totalorder %s16, 0
      %p193 = por %p191, %p192
      %p194 = scmp.ne.s32.totalorder %s183, %s186
      %p195 = scmp.eq.s32.totalorder %s21, 3
      %p196 = por %p194, %p195
      %p197 = scmp.ne.s32.totalorder %s186, %s187
      %p198 = scmp.eq.s32.totalorder %s21, 0
      %p199 = por %p197, %p198
      %p200 = scmp.ne.s32.totalorder %s186, %s187
      %p201 = scmp.eq.s32.totalorder %s22, 3
      %p202 = por %p200, %p201
      %p204 = scmp.ne.s32.totalorder %s187, %s203
      %p205 = scmp.eq.s32.totalorder %s22, 0
      %p206 = por %p204, %p205
      %p207 = scmp.le.s32.totalorder 1, %s16
      %p208 = scmp.lt.s32.totalorder %s16, 5
      %p209 = pnand %p207, %p208
      %p210 = pneg %p209
      // Predicated region
      $region9: #{tpu_custom_call.1} parent=5 // pred_check
        _
      $region10: #{tpu_custom_call.1} parent=5 // pred_check_branch
        %212 = sbr.rel (%p209) target = $region12
      $region11: #{tpu_custom_call.1} parent=5 // pred_region
        %s213 = ssub.s32 %s16, 1
        // Predicated region
        $region13: #{tpu_custom_call.1} parent=11 // pred_check
          %p214 = pneg %p89
        $region14: #{tpu_custom_call.1} parent=11 // pred_check_branch
          %216 = sbr.rel (%p214) target = $region16
        $region15: #{tpu_custom_call.1} parent=11 // pred_region
          _
        $region16: #{tpu_custom_call.1} parent=11 // pred_fallthru
          _
        // Predicated region
        $region17: #{tpu_custom_call.1} parent=11 // pred_check
          %p217 = pneg %p110
        $region18: #{tpu_custom_call.1} parent=11 // pred_check_branch
          %219 = sbr.rel (%p217) target = $region20
        $region19: #{tpu_custom_call.1} parent=11 // pred_region
          _
        $region20: #{tpu_custom_call.1} parent=11 // pred_fallthru
          _
        // Predicated region
        $region21: #{tpu_custom_call.1} parent=11 // pred_check
          %p220 = pneg %p131
        $region22: #{tpu_custom_call.1} parent=11 // pred_check_branch
          %222 = sbr.rel (%p220) target = $region24
        $region23: #{tpu_custom_call.1} parent=11 // pred_region
          _
        $region24: #{tpu_custom_call.1} parent=11 // pred_fallthru
          _
        // Predicated region
        $region25: #{tpu_custom_call.1} parent=11 // pred_check
          %p223 = pneg %p152
        $region26: #{tpu_custom_call.1} parent=11 // pred_check_branch
          %225 = sbr.rel (%p223) target = $region28
        $region27: #{tpu_custom_call.1} parent=11 // pred_region
          _
        $region28: #{tpu_custom_call.1} parent=11 // pred_fallthru
          _
        // Predicated region
        $region29: #{tpu_custom_call.1} parent=11 // pred_check
          %p226 = pneg %p173
        $region30: #{tpu_custom_call.1} parent=11 // pred_check_branch
          %228 = sbr.rel (%p226) target = $region32
        $region31: #{tpu_custom_call.1} parent=11 // pred_region
          _
        $region32: #{tpu_custom_call.1} parent=11 // pred_fallthru
          _
      $region12: #{tpu_custom_call.1} parent=5 // pred_fallthru
        _
      %p229 = scmp.lt.s32.totalorder %s16, 4
      // Predicated region
      $region33: #{tpu_custom_call.1} parent=5 // pred_check
        %p230 = pneg %p229
      $region34: #{tpu_custom_call.1} parent=5 // pred_check_branch
        %232 = sbr.rel (%p230) target = $region36
      $region35: #{tpu_custom_call.1} parent=5 // pred_region
        // Predicated region
        $region37: #{tpu_custom_call.1} parent=35 // pred_check
          %p233 = pneg %p36
        $region38: #{tpu_custom_call.1} parent=35 // pred_check_branch
          %235 = sbr.rel (%p233) target = $region40
        $region39: #{tpu_custom_call.1} parent=35 // pred_region
          %p236 = scmp.lt.s32.totalorder %s16, 3
          %s237 = scalar_select %p236, %s16, 3
          %s238 = smul.addr %s237, 2
          %s239 = smul.addr %s238, 8
          %s240 = scalar_lea.vmem %s0, %s239
        $region40: #{tpu_custom_call.1} parent=35 // pred_fallthru
          _
        // Predicated region
        $region41: #{tpu_custom_call.1} parent=35 // pred_check
          %p241 = pneg %p62
        $region42: #{tpu_custom_call.1} parent=35 // pred_check_branch
          %243 = sbr.rel (%p241) target = $region44
        $region43: #{tpu_custom_call.1} parent=35 // pred_region
          %p244 = scmp.lt.s32.totalorder %s16, 3
          %s245 = scalar_select %p244, %s16, 3
          %s246 = smul.addr %s245, 2
          %s247 = smul.addr %s246, 2
          %s248 = scalar_lea.vmem %s1, %s247
        $region44: #{tpu_custom_call.1} parent=35 // pred_fallthru
          _
      $region36: #{tpu_custom_call.1} parent=5 // pred_fallthru
        _
      %p249 = scmp.le.s32.totalorder 1, %s16
      %p250 = scmp.lt.s32.totalorder %s16, 5
      %p251 = pnand %p249, %p250
      %p252 = pneg %p251
      // Predicated region
      $region45: #{tpu_custom_call.1} parent=5 // pred_check
        _
      $region46: #{tpu_custom_call.1} parent=5 // pred_check_branch
        %254 = sbr.rel (%p251) target = $region48
      $region47: #{tpu_custom_call.1} parent=5 // pred_region
        %s255 = ssub.s32 %s16, 1
        %p256 = scmp.lt.s32.totalorder %s21, 3
        %s257 = scalar_select %p256, %s21, 3
        %s258 = smul.addr %s257, 2
        %s259 = smul.addr %s258, 8
        %s260 = scalar_lea.vmem %s0, %s259
        %p261 = pneg %p42
        %p262 = pneg %p39
        %p263 = scmp.lt.s32.totalorder %s21, 3
        %s264 = scalar_select %p263, %s21, 3
        %s265 = smul.addr %s264, 2
        %s266 = smul.addr %s265, 2
        %s267 = scalar_lea.vmem %s1, %s266
        %p268 = pneg %p68
        %p269 = pneg %p65
        %p270 = pneg %p89
        %p271 = pneg %p86
        %p272 = pneg %p110
        %p273 = pneg %p107
        %p274 = pneg %p131
        %p275 = pneg %p128
        %p276 = pneg %p152
        %p277 = pneg %p149
        %p278 = pneg %p173
        %p279 = pneg %p170
        %p280 = pneg %p199
        %p281 = pneg %p196
        %s282 = sand.u32 %s186, 1
        %s283 = scalar_lea.sflag [#allocation4], %s282
        %s284 = sand.u32 %s186, 1
        %s285 = smul.addr %s284, 16
        %s286 = scalar_lea.vmem [#allocation3], %s285
        %p287 = scmp.lt.s32.totalorder %s21, 3
        %s288 = scalar_select %p287, %s21, 3
        %s289 = smul.addr %s288, 2
        %s290 = smul.addr %s289, 8
        %s291 = scalar_lea.vmem %s0, %s290
        %p292 = scmp.lt.s32.totalorder %s21, 3
        %s293 = scalar_select %p292, %s21, 3
        %s294 = smul.addr %s293, 2
        %s295 = smul.addr %s294, 2
        %s296 = scalar_lea.vmem %s1, %s295
        %v297 = vld [vmem:[%s291] sm:$0xff]
        %v298 = vld [vmem:[%s291 + $0x8] sm:$0xff]
        %v299 = vld [vmem:[%s296] sm:$0x3]
        %v300 = vld [vmem:[%s296 + $0x2] sm:$0x3]
        %v301 = vunpack.c.0.s8 %v299
        %v302 = vunpack.c.0.s8 %v300
        %vm303 = vcmp.gt.s32.totalorder %v301, 0
        %vm304 = vcmp.gt.s32.totalorder %v302, 0
        %v305 = vld [vmem:[%s2] sm:$0xff]
        %v306 = vld [vmem:[%s2 + $0x8] sm:$0xf]
        %vm307 = vcmask 97280
        %v309 = vsel %vm307, %v297, 0
        %v312 = vsel %vm307, %v298, 0
        %vm314 = vcmask 1043456
        %v316 = vsel %vm314, %v306, 0
        %318 = vmatprep.subr.mxu0 0.0
        %319 = vmatpush1.msra.mxu0 %v305
        %320 = vmatprep.subr.mxu0 0.0
        %321 = vmatpush1.msra.mxu0 %v316
        %322 = vmatprep.subr.mxu0 0.0
        %323 = vmatpush1.msra.mxu0 0.0
        %324 = vmatprep.subr.mxu0 0.0
        %325 = vmatpush1.msra.mxu0 0.0
        %326 = vmatprep.subr.mxu0 0.0
        %327 = vmatpush1.msra.mxu0 0.0
        %328 = vmatprep.subr.mxu0 0.0
        %329 = vmatpush1.msra.mxu0 0.0
        %330 = vmatprep.subr.mxu0 0.0
        %331 = vmatpush1.msra.mxu0 0.0
        %332 = vmatprep.subr.mxu0 0.0
        %333 = vmatpush1.msra.mxu0 0.0
        %334 = vmatprep.subr.mxu0 0.0
        %335 = vmatpush1.msra.mxu0 0.0
        %336 = vmatprep.subr.mxu0 0.0
        %337 = vmatpush1.msra.mxu0 0.0
        %338 = vmatprep.subr.mxu0 0.0
        %339 = vmatpush1.msra.mxu0 0.0
        %340 = vmatprep.subr.mxu0 0.0
        %341 = vmatpush1.msra.mxu0 0.0
        %342 = vmatprep.subr.mxu0 0.0
        %343 = vmatpush1.msra.mxu0 0.0
        %344 = vmatprep.subr.mxu0 0.0
        %345 = vmatpush1.msra.mxu0 0.0
        %346 = vmatprep.subr.mxu0 0.0
        %347 = vmatpush1.msra.mxu0 0.0
        %348 = vmatprep.subr.mxu0 0.0
        %349 = vmatpush1.msra.mxu0 0.0
        %350 = vmatprep.subr.mxu0 0.0
        %351 = vmatpush1.msra.mxu0 0.0
        %352 = vmatprep.subr.mxu0 0.0
        %353 = vmatpush1.msra.mxu0 0.0
        %354 = vmatprep.subr.mxu0 0.0
        %355 = vmatpush1.msra.mxu0 0.0
        %356 = vmatprep.subr.mxu0 0.0
        %357 = vmatpush1.msra.mxu0 0.0
        %358 = vmatprep.subr.mxu0 0.0
        %359 = vmatpush1.msra.mxu0 0.0
        %360 = vmatprep.subr.mxu0 0.0
        %361 = vmatpush1.msra.mxu0 0.0
        %362 = vmatprep.subr.mxu0 0.0
        %363 = vmatpush1.msra.mxu0 0.0
        %364 = vmatprep.subr.mxu0 0.0
        %365 = vmatpush1.msra.mxu0 0.0
        %366 = vmatprep.subr.mxu0 0.0
        %367 = vmatpush1.msra.mxu0 0.0
        %368 = vmatprep.subr.mxu0 0.0
        %369 = vmatpush1.msra.mxu0 0.0
        %370 = vmatprep.subr.mxu0 0.0
        %371 = vmatpush1.msra.mxu0 0.0
        %372 = vmatprep.subr.mxu0 0.0
        %373 = vmatpush1.msra.mxu0 0.0
        %374 = vmatprep.subr.mxu0 0.0
        %375 = vmatpush1.msra.mxu0 0.0
        %376 = vmatprep.subr.mxu0 0.0
        %377 = vmatpush1.msra.mxu0 0.0
        %378 = vmatprep.subr.mxu0 0.0
        %379 = vmatpush1.msra.mxu0 0.0
        %380 = vmatprep.subr.mxu0 0.0
        %381 = vmatpush1.msra.mxu0 0.0
        %382 = vmatprep.mubr.f32.mxu0 0.0
        %383 = vmatmul.mubr.f32.gmra.mrb[0].mxu0 %v309
        %v384 = vpop.f32.mrb[0].mxu0
        %v385 = vadd.f32 0.0, %v384
        %v386 = vpop.f32.mrb[0].mxu0
        %387 = vmatprep.mubr.f32.mxu0 0.0
        %388 = vmatmul.mubr.f32.gmra.mrb[0].mxu0 %v312
        %v389 = vpop.f32.mrb[0].mxu0
        %v390 = vadd.f32 0.0, %v389
        %v391 = vpop.f32.mrb[0].mxu0
        %392 = vdwg.mxu0
        %v393 = vld [vmem:[%s3] sm:$0xff]
        %v394 = vld [vmem:[%s3 + $0x8] sm:$0xff]
        %v395 = vld [vmem:[%s3 + $0x10] sm:$0xff]
        %vm396 = vcmask 195584
        %v398 = vsel %vm396, %v385, 0
        %v401 = vsel %vm396, %v390, 0
        %403 = vmatprep.subr.mxu0 0.0
        %404 = vmatpush1.msra.mxu0 %v393
        %405 = vmatprep.subr.mxu0 0.0
        %406 = vmatpush1.msra.mxu0 %v394
        %407 = vmatprep.subr.mxu0 0.0
        %408 = vmatpush1.msra.mxu0 %v395
        %409 = vmatprep.subr.mxu0 0.0
        %410 = vmatpush1.msra.mxu0 0.0
        %411 = vmatprep.subr.mxu0 0.0
        %412 = vmatpush1.msra.mxu0 0.0
        %413 = vmatprep.subr.mxu0 0.0
        %414 = vmatpush1.msra.mxu0 0.0
        %415 = vmatprep.subr.mxu0 0.0
        %416 = vmatpush1.msra.mxu0 0.0
        %417 = vmatprep.subr.mxu0 0.0
        %418 = vmatpush1.msra.mxu0 0.0
        %419 = vmatprep.subr.mxu0 0.0
        %420 = vmatpush1.msra.mxu0 0.0
        %421 = vmatprep.subr.mxu0 0.0
        %422 = vmatpush1.msra.mxu0 0.0
        %423 = vmatprep.subr.mxu0 0.0
        %424 = vmatpush1.msra.mxu0 0.0
        %425 = vmatprep.subr.mxu0 0.0
        %426 = vmatpush1.msra.mxu0 0.0
        %427 = vmatprep.subr.mxu0 0.0
        %428 = vmatpush1.msra.mxu0 0.0
        %429 = vmatprep.subr.mxu0 0.0
        %430 = vmatpush1.msra.mxu0 0.0
        %431 = vmatprep.subr.mxu0 0.0
        %432 = vmatpush1.msra.mxu0 0.0
        %433 = vmatprep.subr.mxu0 0.0
        %434 = vmatpush1.msra.mxu0 0.0
        %435 = vmatprep.subr.mxu0 0.0
        %436 = vmatpush1.msra.mxu0 0.0
        %437 = vmatprep.subr.mxu0 0.0
        %438 = vmatpush1.msra.mxu0 0.0
        %439 = vmatprep.subr.mxu0 0.0
        %440 = vmatpush1.msra.mxu0 0.0
        %441 = vmatprep.subr.mxu0 0.0
        %442 = vmatpush1.msra.mxu0 0.0
        %443 = vmatprep.subr.mxu0 0.0
        %444 = vmatpush1.msra.mxu0 0.0
        %445 = vmatprep.subr.mxu0 0.0
        %446 = vmatpush1.msra.mxu0 0.0
        %447 = vmatprep.subr.mxu0 0.0
        %448 = vmatpush1.msra.mxu0 0.0
        %449 = vmatprep.subr.mxu0 0.0
        %450 = vmatpush1.msra.mxu0 0.0
        %451 = vmatprep.subr.mxu0 0.0
        %452 = vmatpush1.msra.mxu0 0.0
        %453 = vmatprep.subr.mxu0 0.0
        %454 = vmatpush1.msra.mxu0 0.0
        %455 = vmatprep.subr.mxu0 0.0
        %456 = vmatpush1.msra.mxu0 0.0
        %457 = vmatprep.subr.mxu0 0.0
        %458 = vmatpush1.msra.mxu0 0.0
        %459 = vmatprep.subr.mxu0 0.0
        %460 = vmatpush1.msra.mxu0 0.0
        %461 = vmatprep.subr.mxu0 0.0
        %462 = vmatpush1.msra.mxu0 0.0
        %463 = vmatprep.subr.mxu0 0.0
        %464 = vmatpush1.msra.mxu0 0.0
        %465 = vmatprep.subr.mxu0 0.0
        %466 = vmatpush1.msra.mxu0 0.0
        %467 = vmatprep.mubr.f32.mxu0 0.0
        %468 = vmatmul.mubr.f32.gmra.mrb[0].mxu0 %v398
        %v469 = vpop.f32.mrb[0].mxu0
        %v470 = vadd.f32 0.0, %v469
        %v471 = vpop.f32.mrb[0].mxu0
        %472 = vmatprep.mubr.f32.mxu0 0.0
        %473 = vmatmul.mubr.f32.gmra.mrb[0].mxu0 %v401
        %v474 = vpop.f32.mrb[0].mxu0
        %v475 = vadd.f32 0.0, %v474
        %v476 = vpop.f32.mrb[0].mxu0
        %477 = vdwg.mxu0
        %v478 = vld [vmem:[%s4] sm:$0x7]
        %v480 = vsel %vm396, %v478, 0
        %482 = vmatprep.subr.mxu0 0.0
        %483 = vmatpush1.xpose.msra.mxu0 %v398
        %484 = vmatprep.subr.mxu0 0.0
        %485 = vmatpush1.xpose.msra.mxu0 %v401
        %486 = vmatprep.subr.mxu0 0.0
        %487 = vmatpush1.xpose.msra.mxu0 0.0
        %488 = vmatprep.subr.mxu0 0.0
        %489 = vmatpush1.xpose.msra.mxu0 0.0
        %490 = vmatprep.subr.mxu0 0.0
        %491 = vmatpush1.xpose.msra.mxu0 0.0
        %492 = vmatprep.subr.mxu0 0.0
        %493 = vmatpush1.xpose.msra.mxu0 0.0
        %494 = vmatprep.subr.mxu0 0.0
        %495 = vmatpush1.xpose.msra.mxu0 0.0
        %496 = vmatprep.subr.mxu0 0.0
        %497 = vmatpush1.xpose.msra.mxu0 0.0
        %498 = vmatprep.subr.mxu0 0.0
        %499 = vmatpush1.xpose.msra.mxu0 0.0
        %500 = vmatprep.subr.mxu0 0.0
        %501 = vmatpush1.xpose.msra.mxu0 0.0
        %502 = vmatprep.subr.mxu0 0.0
        %503 = vmatpush1.xpose.msra.mxu0 0.0
        %504 = vmatprep.subr.mxu0 0.0
        %505 = vmatpush1.xpose.msra.mxu0 0.0
        %506 = vmatprep.subr.mxu0 0.0
        %507 = vmatpush1.xpose.msra.mxu0 0.0
        %508 = vmatprep.subr.mxu0 0.0
        %509 = vmatpush1.xpose.msra.mxu0 0.0
        %510 = vmatprep.subr.mxu0 0.0
        %511 = vmatpush1.xpose.msra.mxu0 0.0
        %512 = vmatprep.subr.mxu0 0.0
        %513 = vmatpush1.xpose.msra.mxu0 0.0
        %514 = vmatprep.subr.mxu0 0.0
        %515 = vmatpush1.xpose.msra.mxu0 0.0
        %516 = vmatprep.subr.mxu0 0.0
        %517 = vmatpush1.xpose.msra.mxu0 0.0
        %518 = vmatprep.subr.mxu0 0.0
        %519 = vmatpush1.xpose.msra.mxu0 0.0
        %520 = vmatprep.subr.mxu0 0.0
        %521 = vmatpush1.xpose.msra.mxu0 0.0
        %522 = vmatprep.subr.mxu0 0.0
        %523 = vmatpush1.xpose.msra.mxu0 0.0
        %524 = vmatprep.subr.mxu0 0.0
        %525 = vmatpush1.xpose.msra.mxu0 0.0
        %526 = vmatprep.subr.mxu0 0.0
        %527 = vmatpush1.xpose.msra.mxu0 0.0
        %528 = vmatprep.subr.mxu0 0.0
        %529 = vmatpush1.xpose.msra.mxu0 0.0
        %530 = vmatprep.subr.mxu0 0.0
        %531 = vmatpush1.xpose.msra.mxu0 0.0
        %532 = vmatprep.subr.mxu0 0.0
        %533 = vmatpush1.xpose.msra.mxu0 0.0
        %534 = vmatprep.subr.mxu0 0.0
        %535 = vmatpush1.xpose.msra.mxu0 0.0
        %536 = vmatprep.subr.mxu0 0.0
        %537 = vmatpush1.xpose.msra.mxu0 0.0
        %538 = vmatprep.subr.mxu0 0.0
        %539 = vmatpush1.xpose.msra.mxu0 0.0
        %540 = vmatprep.subr.mxu0 0.0
        %541 = vmatpush1.xpose.msra.mxu0 0.0
        %542 = vmatprep.subr.mxu0 0.0
        %543 = vmatpush1.xpose.msra.mxu0 0.0
        %544 = vmatprep.subr.mxu0 0.0
        %545 = vmatpush1.xpose.msra.mxu0 0.0
        %546 = vmatprep.mubr.f32.mxu0 0.0
        %547 = vmatmul.mubr.f32.gmra.mrb[0].mxu0 %v480
        %v548 = vpop.f32.mrb[0].mxu0
        %v549 = vadd.f32 0.0, %v548
        %v550 = vpop.f32.mrb[0].mxu0
        %551 = vdwg.mxu0
        %553 = vset.pattern.permute.xlu0 0
        %554 = vperm.xlu0 %553, %v470
        %v555 = vpop.permute.xlu0 %554
        %558 = vset.pattern.permute.xlu0 0
        %559 = vperm.xlu0 %558, %v475
        %v560 = vpop.permute.xlu0 %559
        %v562 = vlaneseq
        %v563 = vshrl.u32 %v562, 7
        %v564 = vsub.s32 0, %v563
        %v565 = vrot.slane %v549, %v564
        %v566 = vadd.f32 %v555, %v565
        %v567 = vadd.f32 %v560, %v565
        %vm568 = vcmp.gt.f32.partialorder %v566, 0.0
        %vm569 = vcmp.gt.f32.partialorder %v567, 0.0
        %v570 = vmul.f32 %v566, 0.2
        %v571 = vmul.f32 %v567, 0.2
        %v572 = vsel %vm568, %v566, %v570
        %v573 = vsel %vm569, %v567, %v571
        %v574 = vsel %vm303, %v572, -1e+12
        %v575 = vsel %vm304, %v573, -1e+12
        %vm576 = vcmask 130048
        %v577 = vsel %vm576, %v574, -inf
        %578 = vmax.xlane.f32.xlu0 %v577
        %v579 = vpop.xlane.xlu0 %578
        %v580 = vsel %vm576, %v575, -inf
        %581 = vmax.xlane.f32.xlu0 %v580
        %v582 = vpop.xlane.xlu0 %581
        %v583 = vsub.f32 %v574, %v579
        %v584 = vsub.f32 %v575, %v582
        %v585 = vmul.f32 %v583, 1.442695
        %v586 = vpow.pop %v585
        %v587 = vmul.f32 %v584, 1.442695
        %v588 = vpow.pop %v587
        %v589 = vsel %vm576, %v586, 0.0
        %590 = vadd.xlane.f32.xlu0 %v589
        %v591 = vpop.xlane.xlu0 %590
        %v592 = vsel %vm576, %v588, 0.0
        %593 = vadd.xlane.f32.xlu0 %v592
        %v594 = vpop.xlane.xlu0 %593
        %v596 = vsel %vm576, %v586, 0
        %v599 = vsel %vm576, %v588, 0
        %601 = vmatprep.subr.mxu0 0.0
        %602 = vmatpush1.msra.mxu0 %v385
        %603 = vmatprep.subr.mxu0 0.0
        %604 = vmatpush1.msra.mxu0 %v390
        %605 = vmatprep.subr.mxu0 0.0
        %606 = vmatpush1.msra.mxu0 0.0
        %607 = vmatprep.subr.mxu0 0.0
        %608 = vmatpush1.msra.mxu0 0.0
        %609 = vmatprep.subr.mxu0 0.0
        %610 = vmatpush1.msra.mxu0 0.0
        %611 = vmatprep.subr.mxu0 0.0
        %612 = vmatpush1.msra.mxu0 0.0
        %613 = vmatprep.subr.mxu0 0.0
        %614 = vmatpush1.msra.mxu0 0.0
        %615 = vmatprep.subr.mxu0 0.0
        %616 = vmatpush1.msra.mxu0 0.0
        %617 = vmatprep.subr.mxu0 0.0
        %618 = vmatpush1.msra.mxu0 0.0
        %619 = vmatprep.subr.mxu0 0.0
        %620 = vmatpush1.msra.mxu0 0.0
        %621 = vmatprep.subr.mxu0 0.0
        %622 = vmatpush1.msra.mxu0 0.0
        %623 = vmatprep.subr.mxu0 0.0
        %624 = vmatpush1.msra.mxu0 0.0
        %625 = vmatprep.subr.mxu0 0.0
        %626 = vmatpush1.msra.mxu0 0.0
        %627 = vmatprep.subr.mxu0 0.0
        %628 = vmatpush1.msra.mxu0 0.0
        %629 = vmatprep.subr.mxu0 0.0
        %630 = vmatpush1.msra.mxu0 0.0
        %631 = vmatprep.subr.mxu0 0.0
        %632 = vmatpush1.msra.mxu0 0.0
        %633 = vmatprep.subr.mxu0 0.0
        %634 = vmatpush1.msra.mxu0 0.0
        %635 = vmatprep.subr.mxu0 0.0
        %636 = vmatpush1.msra.mxu0 0.0
        %637 = vmatprep.subr.mxu0 0.0
        %638 = vmatpush1.msra.mxu0 0.0
        %639 = vmatprep.subr.mxu0 0.0
        %640 = vmatpush1.msra.mxu0 0.0
        %641 = vmatprep.subr.mxu0 0.0
        %642 = vmatpush1.msra.mxu0 0.0
        %643 = vmatprep.subr.mxu0 0.0
        %644 = vmatpush1.msra.mxu0 0.0
        %645 = vmatprep.subr.mxu0 0.0
        %646 = vmatpush1.msra.mxu0 0.0
        %647 = vmatprep.subr.mxu0 0.0
        %648 = vmatpush1.msra.mxu0 0.0
        %649 = vmatprep.subr.mxu0 0.0
        %650 = vmatpush1.msra.mxu0 0.0
        %651 = vmatprep.subr.mxu0 0.0
        %652 = vmatpush1.msra.mxu0 0.0
        %653 = vmatprep.subr.mxu0 0.0
        %654 = vmatpush1.msra.mxu0 0.0
        %655 = vmatprep.subr.mxu0 0.0
        %656 = vmatpush1.msra.mxu0 0.0
        %657 = vmatprep.subr.mxu0 0.0
        %658 = vmatpush1.msra.mxu0 0.0
        %659 = vmatprep.subr.mxu0 0.0
        %660 = vmatpush1.msra.mxu0 0.0
        %661 = vmatprep.subr.mxu0 0.0
        %662 = vmatpush1.msra.mxu0 0.0
        %663 = vmatprep.subr.mxu0 0.0
        %664 = vmatpush1.msra.mxu0 0.0
        %665 = vmatprep.mubr.f32.mxu0 0.0
        %666 = vmatmul.mubr.f32.gmra.mrb[0].mxu0 %v596
        %v667 = vpop.f32.mrb[0].mxu0
        %v668 = vadd.f32 0.0, %v667
        %v669 = vpop.f32.mrb[0].mxu0
        %670 = vmatprep.mubr.f32.mxu0 0.0
        %671 = vmatmul.mubr.f32.gmra.mrb[0].mxu0 %v599
        %v672 = vpop.f32.mrb[0].mxu0
        %v673 = vadd.f32 0.0, %v672
        %v674 = vpop.f32.mrb[0].mxu0
        %675 = vdwg.mxu0
        %v676 = vrcp.pop %v591
        %v677 = vrcp.pop %v594
        %v678 = vmul.f32 %v668, %v676
        %v679 = vmul.f32 %v673, %v677
        %vm680 = vcmp.gt.f32.partialorder %v678, 0.0
        %vm681 = vcmp.gt.f32.partialorder %v679, 0.0
        %v682 = vmin.f32 %v678, 0.0
        %v683 = vmin.f32 %v679, 0.0
        %v684 = vmul.f32 %v682, 1.442695
        %v685 = vpow.pop %v684
        %v686 = vmul.f32 %v683, 1.442695
        %v687 = vpow.pop %v686
        %v688 = vsub.f32 %v685, 1.0
        %v689 = vsub.f32 %v687, 1.0
        %v690 = vsel %vm680, %v678, %v688
        %v691 = vsel %vm681, %v679, %v689
        %vm692 = vcmask 64512
        %693 = vst.msk [vmem:[#allocation2] sm:$0xff] %vm692, %v690
        %694 = vst.msk [vmem:[#allocation2 + $0x8] sm:$0xff] %vm692, %v691
        %695 = vset.pattern.permute.xlu0 1
        %696 = vperm.xlu0 %695, %v470
        %v697 = vpop.permute.xlu0 %696
        %699 = vset.pattern.permute.xlu0 1
        %700 = vperm.xlu0 %699, %v475
        %v701 = vpop.permute.xlu0 %700
        %v703 = vlaneseq
        %v704 = vshrl.u32 %v703, 7
        %v705 = vsub.s32 1, %v704
        %v706 = vrot.slane %v549, %v705
        %v707 = vadd.f32 %v697, %v706
        %v708 = vadd.f32 %v701, %v706
        %vm709 = vcmp.gt.f32.partialorder %v707, 0.0
        %vm710 = vcmp.gt.f32.partialorder %v708, 0.0
        %v711 = vmul.f32 %v707, 0.2
        %v712 = vmul.f32 %v708, 0.2
        %v713 = vsel %vm709, %v707, %v711
        %v714 = vsel %vm710, %v708, %v712
        %v715 = vsel %vm303, %v713, -1e+12
        %v716 = vsel %vm304, %v714, -1e+12
        %v717 = vsel %vm576, %v715, -inf
        %718 = vmax.xlane.f32.xlu0 %v717
        %v719 = vpop.xlane.xlu0 %718
        %v720 = vsel %vm576, %v716, -inf
        %721 = vmax.xlane.f32.xlu0 %v720
        %v722 = vpop.xlane.xlu0 %721
        %v723 = vsub.f32 %v715, %v719
        %v724 = vsub.f32 %v716, %v722
        %v725 = vmul.f32 %v723, 1.442695
        %v726 = vpow.pop %v725
        %v727 = vmul.f32 %v724, 1.442695
        %v728 = vpow.pop %v727
        %v729 = vsel %vm576, %v726, 0.0
        %730 = vadd.xlane.f32.xlu0 %v729
        %v731 = vpop.xlane.xlu0 %730
        %v732 = vsel %vm576, %v728, 0.0
        %733 = vadd.xlane.f32.xlu0 %v732
        %v734 = vpop.xlane.xlu0 %733
        %735 = vrot.lane.b32.xlu0 %v385, 120
        %v736 = vpop.permute.xlu0 %735
        %737 = vrot.lane.b32.xlu0 %v390, 120
        %v738 = vpop.permute.xlu0 %737
        %v742 = vsel %vm576, %v726, 0
        %v745 = vsel %vm576, %v728, 0
        %747 = vmatprep.subr.mxu0 0.0
        %748 = vmatpush1.msra.mxu0 %v736
        %749 = vmatprep.subr.mxu0 0.0
        %750 = vmatpush1.msra.mxu0 %v738
        %751 = vmatprep.subr.mxu0 0.0
        %752 = vmatpush1.msra.mxu0 0.0
        %753 = vmatprep.subr.mxu0 0.0
        %754 = vmatpush1.msra.mxu0 0.0
        %755 = vmatprep.subr.mxu0 0.0
        %756 = vmatpush1.msra.mxu0 0.0
        %757 = vmatprep.subr.mxu0 0.0
        %758 = vmatpush1.msra.mxu0 0.0
        %759 = vmatprep.subr.mxu0 0.0
        %760 = vmatpush1.msra.mxu0 0.0
        %761 = vmatprep.subr.mxu0 0.0
        %762 = vmatpush1.msra.mxu0 0.0
        %763 = vmatprep.subr.mxu0 0.0
        %764 = vmatpush1.msra.mxu0 0.0
        %765 = vmatprep.subr.mxu0 0.0
        %766 = vmatpush1.msra.mxu0 0.0
        %767 = vmatprep.subr.mxu0 0.0
        %768 = vmatpush1.msra.mxu0 0.0
        %769 = vmatprep.subr.mxu0 0.0
        %770 = vmatpush1.msra.mxu0 0.0
        %771 = vmatprep.subr.mxu0 0.0
        %772 = vmatpush1.msra.mxu0 0.0
        %773 = vmatprep.subr.mxu0 0.0
        %774 = vmatpush1.msra.mxu0 0.0
        %775 = vmatprep.subr.mxu0 0.0
        %776 = vmatpush1.msra.mxu0 0.0
        %777 = vmatprep.subr.mxu0 0.0
        %778 = vmatpush1.msra.mxu0 0.0
        %779 = vmatprep.subr.mxu0 0.0
        %780 = vmatpush1.msra.mxu0 0.0
        %781 = vmatprep.subr.mxu0 0.0
        %782 = vmatpush1.msra.mxu0 0.0
        %783 = vmatprep.subr.mxu0 0.0
        %784 = vmatpush1.msra.mxu0 0.0
        %785 = vmatprep.subr.mxu0 0.0
        %786 = vmatpush1.msra.mxu0 0.0
        %787 = vmatprep.subr.mxu0 0.0
        %788 = vmatpush1.msra.mxu0 0.0
        %789 = vmatprep.subr.mxu0 0.0
        %790 = vmatpush1.msra.mxu0 0.0
        %791 = vmatprep.subr.mxu0 0.0
        %792 = vmatpush1.msra.mxu0 0.0
        %793 = vmatprep.subr.mxu0 0.0
        %794 = vmatpush1.msra.mxu0 0.0
        %795 = vmatprep.subr.mxu0 0.0
        %796 = vmatpush1.msra.mxu0 0.0
        %797 = vmatprep.subr.mxu0 0.0
        %798 = vmatpush1.msra.mxu0 0.0
        %799 = vmatprep.subr.mxu0 0.0
        %800 = vmatpush1.msra.mxu0 0.0
        %801 = vmatprep.subr.mxu0 0.0
        %802 = vmatpush1.msra.mxu0 0.0
        %803 = vmatprep.subr.mxu0 0.0
        %804 = vmatpush1.msra.mxu0 0.0
        %805 = vmatprep.subr.mxu0 0.0
        %806 = vmatpush1.msra.mxu0 0.0
        %807 = vmatprep.subr.mxu0 0.0
        %808 = vmatpush1.msra.mxu0 0.0
        %809 = vmatprep.subr.mxu0 0.0
        %810 = vmatpush1.msra.mxu0 0.0
        %811 = vmatprep.mubr.f32.mxu0 0.0
        %812 = vmatmul.mubr.f32.gmra.mrb[0].mxu0 %v742
        %v813 = vpop.f32.mrb[0].mxu0
        %v814 = vadd.f32 0.0, %v813
        %v815 = vpop.f32.mrb[0].mxu0
        %816 = vmatprep.mubr.f32.mxu0 0.0
        %817 = vmatmul.mubr.f32.gmra.mrb[0].mxu0 %v745
        %v818 = vpop.f32.mrb[0].mxu0
        %v819 = vadd.f32 0.0, %v818
        %v820 = vpop.f32.mrb[0].mxu0
        %821 = vdwg.mxu0
        %v822 = vrcp.pop %v731
        %v823 = vrcp.pop %v734
        %v824 = vmul.f32 %v814, %v822
        %v825 = vmul.f32 %v819, %v823
        %vm826 = vcmp.gt.f32.partialorder %v824, 0.0
        %vm827 = vcmp.gt.f32.partialorder %v825, 0.0
        %v828 = vmin.f32 %v824, 0.0
        %v829 = vmin.f32 %v825, 0.0
        %v830 = vmul.f32 %v828, 1.442695
        %v831 = vpow.pop %v830
        %v832 = vmul.f32 %v829, 1.442695
        %v833 = vpow.pop %v832
        %v834 = vsub.f32 %v831, 1.0
        %v835 = vsub.f32 %v833, 1.0
        %v836 = vsel %vm826, %v824, %v834
        %v837 = vsel %vm827, %v825, %v835
        %840 = vrot.lane.b32.xlu0 %v836, 8
        %v841 = vpop.permute.xlu0 %840
        %842 = vrot.lane.b32.xlu0 %v837, 8
        %v843 = vpop.permute.xlu0 %842
        %vm846 = vcmask 130112
        %847 = vst.msk [vmem:[#allocation2] sm:$0xff] %vm846, %v841
        %848 = vst.msk [vmem:[#allocation2 + $0x8] sm:$0xff] %vm846, %v843
        %849 = vset.pattern.permute.xlu0 2
        %850 = vperm.xlu0 %849, %v470
        %v851 = vpop.permute.xlu0 %850
        %853 = vset.pattern.permute.xlu0 2
        %854 = vperm.xlu0 %853, %v475
        %v855 = vpop.permute.xlu0 %854
        %v857 = vlaneseq
        %v858 = vshrl.u32 %v857, 7
        %v859 = vsub.s32 2, %v858
        %v860 = vrot.slane %v549, %v859
        %v861 = vadd.f32 %v851, %v860
        %v862 = vadd.f32 %v855, %v860
        %vm863 = vcmp.gt.f32.partialorder %v861, 0.0
        %vm864 = vcmp.gt.f32.partialorder %v862, 0.0
        %v865 = vmul.f32 %v861, 0.2
        %v866 = vmul.f32 %v862, 0.2
        %v867 = vsel %vm863, %v861, %v865
        %v868 = vsel %vm864, %v862, %v866
        %v869 = vsel %vm303, %v867, -1e+12
        %v870 = vsel %vm304, %v868, -1e+12
        %v871 = vsel %vm576, %v869, -inf
        %872 = vmax.xlane.f32.xlu0 %v871
        %v873 = vpop.xlane.xlu0 %872
        %v874 = vsel %vm576, %v870, -inf
        %875 = vmax.xlane.f32.xlu0 %v874
        %v876 = vpop.xlane.xlu0 %875
        %v877 = vsub.f32 %v869, %v873
        %v878 = vsub.f32 %v870, %v876
        %v879 = vmul.f32 %v877, 1.442695
        %v880 = vpow.pop %v879
        %v881 = vmul.f32 %v878, 1.442695
        %v882 = vpow.pop %v881
        %v883 = vsel %vm576, %v880, 0.0
        %884 = vadd.xlane.f32.xlu0 %v883
        %v885 = vpop.xlane.xlu0 %884
        %v886 = vsel %vm576, %v882, 0.0
        %887 = vadd.xlane.f32.xlu0 %v886
        %v888 = vpop.xlane.xlu0 %887
        %889 = vrot.lane.b32.xlu0 %v385, 112
        %v890 = vpop.permute.xlu0 %889
        %891 = vrot.lane.b32.xlu0 %v390, 112
        %v892 = vpop.permute.xlu0 %891
        %v896 = vsel %vm576, %v880, 0
        %v899 = vsel %vm576, %v882, 0
        %901 = vmatprep.subr.mxu0 0.0
        %902 = vmatpush1.msra.mxu0 %v890
        %903 = vmatprep.subr.mxu0 0.0
        %904 = vmatpush1.msra.mxu0 %v892
        %905 = vmatprep.subr.mxu0 0.0
        %906 = vmatpush1.msra.mxu0 0.0
        %907 = vmatprep.subr.mxu0 0.0
        %908 = vmatpush1.msra.mxu0 0.0
        %909 = vmatprep.subr.mxu0 0.0
        %910 = vmatpush1.msra.mxu0 0.0
        %911 = vmatprep.subr.mxu0 0.0
        %912 = vmatpush1.msra.mxu0 0.0
        %913 = vmatprep.subr.mxu0 0.0
        %914 = vmatpush1.msra.mxu0 0.0
        %915 = vmatprep.subr.mxu0 0.0
        %916 = vmatpush1.msra.mxu0 0.0
        %917 = vmatprep.subr.mxu0 0.0
        %918 = vmatpush1.msra.mxu0 0.0
        %919 = vmatprep.subr.mxu0 0.0
        %920 = vmatpush1.msra.mxu0 0.0
        %921 = vmatprep.subr.mxu0 0.0
        %922 = vmatpush1.msra.mxu0 0.0
        %923 = vmatprep.subr.mxu0 0.0
        %924 = vmatpush1.msra.mxu0 0.0
        %925 = vmatprep.subr.mxu0 0.0
        %926 = vmatpush1.msra.mxu0 0.0
        %927 = vmatprep.subr.mxu0 0.0
        %928 = vmatpush1.msra.mxu0 0.0
        %929 = vmatprep.subr.mxu0 0.0
        %930 = vmatpush1.msra.mxu0 0.0
        %931 = vmatprep.subr.mxu0 0.0
        %932 = vmatpush1.msra.mxu0 0.0
        %933 = vmatprep.subr.mxu0 0.0
        %934 = vmatpush1.msra.mxu0 0.0
        %935 = vmatprep.subr.mxu0 0.0
        %936 = vmatpush1.msra.mxu0 0.0
        %937 = vmatprep.subr.mxu0 0.0
        %938 = vmatpush1.msra.mxu0 0.0
        %939 = vmatprep.subr.mxu0 0.0
        %940 = vmatpush1.msra.mxu0 0.0
        %941 = vmatprep.subr.mxu0 0.0
        %942 = vmatpush1.msra.mxu0 0.0
        %943 = vmatprep.subr.mxu0 0.0
        %944 = vmatpush1.msra.mxu0 0.0
        %945 = vmatprep.subr.mxu0 0.0
        %946 = vmatpush1.msra.mxu0 0.0
        %947 = vmatprep.subr.mxu0 0.0
        %948 = vmatpush1.msra.mxu0 0.0
        %949 = vmatprep.subr.mxu0 0.0
        %950 = vmatpush1.msra.mxu0 0.0
        %951 = vmatprep.subr.mxu0 0.0
        %952 = vmatpush1.msra.mxu0 0.0
        %953 = vmatprep.subr.mxu0 0.0
        %954 = vmatpush1.msra.mxu0 0.0
        %955 = vmatprep.subr.mxu0 0.0
        %956 = vmatpush1.msra.mxu0 0.0
        %957 = vmatprep.subr.mxu0 0.0
        %958 = vmatpush1.msra.mxu0 0.0
        %959 = vmatprep.subr.mxu0 0.0
        %960 = vmatpush1.msra.mxu0 0.0
        %961 = vmatprep.subr.mxu0 0.0
        %962 = vmatpush1.msra.mxu0 0.0
        %963 = vmatprep.subr.mxu0 0.0
        %964 = vmatpush1.msra.mxu0 0.0
        %965 = vmatprep.mubr.f32.mxu0 0.0
        %966 = vmatmul.mubr.f32.gmra.mrb[0].mxu0 %v896
        %v967 = vpop.f32.mrb[0].mxu0
        %v968 = vadd.f32 0.0, %v967
        %v969 = vpop.f32.mrb[0].mxu0
        %970 = vmatprep.mubr.f32.mxu0 0.0
        %971 = vmatmul.mubr.f32.gmra.mrb[0].mxu0 %v899
        %v972 = vpop.f32.mrb[0].mxu0
        %v973 = vadd.f32 0.0, %v972
        %v974 = vpop.f32.mrb[0].mxu0
        %975 = vdwg.mxu0
        %v976 = vrcp.pop %v885
        %v977 = vrcp.pop %v888
        %v978 = vmul.f32 %v968, %v976
        %v979 = vmul.f32 %v973, %v977
        %vm980 = vcmp.gt.f32.partialorder %v978, 0.0
        %vm981 = vcmp.gt.f32.partialorder %v979, 0.0
        %v982 = vmin.f32 %v978, 0.0
        %v983 = vmin.f32 %v979, 0.0
        %v984 = vmul.f32 %v982, 1.442695
        %v985 = vpow.pop %v984
        %v986 = vmul.f32 %v983, 1.442695
        %v987 = vpow.pop %v986
        %v988 = vsub.f32 %v985, 1.0
        %v989 = vsub.f32 %v987, 1.0
        %v990 = vsel %vm980, %v978, %v988
        %v991 = vsel %vm981, %v979, %v989
        %994 = vrot.lane.b32.xlu0 %v990, 16
        %v995 = vpop.permute.xlu0 %994
        %996 = vrot.lane.b32.xlu0 %v991, 16
        %v997 = vpop.permute.xlu0 %996
        %vm1000 = vcmask 195712
        %1001 = vst.msk [vmem:[#allocation2] sm:$0xff] %vm1000, %v995
        %1002 = vst.msk [vmem:[#allocation2 + $0x8] sm:$0xff] %vm1000, %v997
        %v1003 = vld [vmem:[#allocation2] sm:$0xff]
        %v1004 = vld [vmem:[#allocation2 + $0x8] sm:$0xff]
        %v1005 = vld [vmem:[%s5] sm:$0xff]
        %v1006 = vld [vmem:[%s5 + $0x8] sm:$0xff]
        %v1007 = vld [vmem:[%s5 + $0x10] sm:$0xff]
        %v1009 = vsel %vm396, %v1003, 0
        %v1012 = vsel %vm396, %v1004, 0
        %1014 = vmatprep.subr.mxu0 0.0
        %1015 = vmatpush1.msra.mxu0 %v1005
        %1016 = vmatprep.subr.mxu0 0.0
        %1017 = vmatpush1.msra.mxu0 %v1006
        %1018 = vmatprep.subr.mxu0 0.0
        %1019 = vmatpush1.msra.mxu0 %v1007
        %1020 = vmatprep.subr.mxu0 0.0
        %1021 = vmatpush1.msra.mxu0 0.0
        %1022 = vmatprep.subr.mxu0 0.0
        %1023 = vmatpush1.msra.mxu0 0.0
        %1024 = vmatprep.subr.mxu0 0.0
        %1025 = vmatpush1.msra.mxu0 0.0
        %1026 = vmatprep.subr.mxu0 0.0
        %1027 = vmatpush1.msra.mxu0 0.0
        %1028 = vmatprep.subr.mxu0 0.0
        %1029 = vmatpush1.msra.mxu0 0.0
        %1030 = vmatprep.subr.mxu0 0.0
        %1031 = vmatpush1.msra.mxu0 0.0
        %1032 = vmatprep.subr.mxu0 0.0
        %1033 = vmatpush1.msra.mxu0 0.0
        %1034 = vmatprep.subr.mxu0 0.0
        %1035 = vmatpush1.msra.mxu0 0.0
        %1036 = vmatprep.subr.mxu0 0.0
        %1037 = vmatpush1.msra.mxu0 0.0
        %1038 = vmatprep.subr.mxu0 0.0
        %1039 = vmatpush1.msra.mxu0 0.0
        %1040 = vmatprep.subr.mxu0 0.0
        %1041 = vmatpush1.msra.mxu0 0.0
        %1042 = vmatprep.subr.mxu0 0.0
        %1043 = vmatpush1.msra.mxu0 0.0
        %1044 = vmatprep.subr.mxu0 0.0
        %1045 = vmatpush1.msra.mxu0 0.0
        %1046 = vmatprep.subr.mxu0 0.0
        %1047 = vmatpush1.msra.mxu0 0.0
        %1048 = vmatprep.subr.mxu0 0.0
        %1049 = vmatpush1.msra.mxu0 0.0
        %1050 = vmatprep.subr.mxu0 0.0
        %1051 = vmatpush1.msra.mxu0 0.0
        %1052 = vmatprep.subr.mxu0 0.0
        %1053 = vmatpush1.msra.mxu0 0.0
        %1054 = vmatprep.subr.mxu0 0.0
        %1055 = vmatpush1.msra.mxu0 0.0
        %1056 = vmatprep.subr.mxu0 0.0
        %1057 = vmatpush1.msra.mxu0 0.0
        %1058 = vmatprep.subr.mxu0 0.0
        %1059 = vmatpush1.msra.mxu0 0.0
        %1060 = vmatprep.subr.mxu0 0.0
        %1061 = vmatpush1.msra.mxu0 0.0
        %1062 = vmatprep.subr.mxu0 0.0
        %1063 = vmatpush1.msra.mxu0 0.0
        %1064 = vmatprep.subr.mxu0 0.0
        %1065 = vmatpush1.msra.mxu0 0.0
        %1066 = vmatprep.subr.mxu0 0.0
        %1067 = vmatpush1.msra.mxu0 0.0
        %1068 = vmatprep.subr.mxu0 0.0
        %1069 = vmatpush1.msra.mxu0 0.0
        %1070 = vmatprep.subr.mxu0 0.0
        %1071 = vmatpush1.msra.mxu0 0.0
        %1072 = vmatprep.subr.mxu0 0.0
        %1073 = vmatpush1.msra.mxu0 0.0
        %1074 = vmatprep.subr.mxu0 0.0
        %1075 = vmatpush1.msra.mxu0 0.0
        %1076 = vmatprep.subr.mxu0 0.0
        %1077 = vmatpush1.msra.mxu0 0.0
        %1078 = vmatprep.mubr.f32.mxu0 0.0
        %1079 = vmatmul.mubr.f32.gmra.mrb[0].mxu0 %v1009
        %v1080 = vpop.f32.mrb[0].mxu0
        %v1081 = vadd.f32 0.0, %v1080
        %v1082 = vpop.f32.mrb[0].mxu0
        %1083 = vmatprep.mubr.f32.mxu0 0.0
        %1084 = vmatmul.mubr.f32.gmra.mrb[0].mxu0 %v1012
        %v1085 = vpop.f32.mrb[0].mxu0
        %v1086 = vadd.f32 0.0, %v1085
        %v1087 = vpop.f32.mrb[0].mxu0
        %1088 = vdwg.mxu0
        %v1089 = vld [vmem:[%s6] sm:$0x3]
        %v1090 = vlaneseq
        %v1091 = vshrl.u32 %v1090, 7
        %v1092 = vsub.s32 0, %v1091
        %v1093 = vrot.slane %v1089, %v1092
        %v1094 = vmul.f32 %v1081, %v1093
        %v1095 = vmul.f32 %v1086, %v1093
        %1096 = vadd.xlane.f32.xlu0 %v1094
        %v1097 = vpop.xlane.xlu0 %1096
        %1098 = vadd.xlane.f32.xlu0 %v1095
        %v1099 = vpop.xlane.xlu0 %1098
        %v1101 = vrot.slane %v1089, 1
        %1103 = vmatprep.subr.mxu0 0.0
        %1104 = vmatpush1.xpose.msra.mxu0 %v1081
        %1105 = vmatprep.subr.mxu0 0.0
        %1106 = vmatpush1.xpose.msra.mxu0 %v1086
        %1107 = vmatprep.subr.mxu0 0.0
        %1108 = vmatpush1.xpose.msra.mxu0 0.0
        %1109 = vmatprep.subr.mxu0 0.0
        %1110 = vmatpush1.xpose.msra.mxu0 0.0
        %1111 = vmatprep.subr.mxu0 0.0
        %1112 = vmatpush1.xpose.msra.mxu0 0.0
        %1113 = vmatprep.subr.mxu0 0.0
        %1114 = vmatpush1.xpose.msra.mxu0 0.0
        %1115 = vmatprep.subr.mxu0 0.0
        %1116 = vmatpush1.xpose.msra.mxu0 0.0
        %1117 = vmatprep.subr.mxu0 0.0
        %1118 = vmatpush1.xpose.msra.mxu0 0.0
        %1119 = vmatprep.subr.mxu0 0.0
        %1120 = vmatpush1.xpose.msra.mxu0 0.0
        %1121 = vmatprep.subr.mxu0 0.0
        %1122 = vmatpush1.xpose.msra.mxu0 0.0
        %1123 = vmatprep.subr.mxu0 0.0
        %1124 = vmatpush1.xpose.msra.mxu0 0.0
        %1125 = vmatprep.subr.mxu0 0.0
        %1126 = vmatpush1.xpose.msra.mxu0 0.0
        %1127 = vmatprep.subr.mxu0 0.0
        %1128 = vmatpush1.xpose.msra.mxu0 0.0
        %1129 = vmatprep.subr.mxu0 0.0
        %1130 = vmatpush1.xpose.msra.mxu0 0.0
        %1131 = vmatprep.subr.mxu0 0.0
        %1132 = vmatpush1.xpose.msra.mxu0 0.0
        %1133 = vmatprep.subr.mxu0 0.0
        %1134 = vmatpush1.xpose.msra.mxu0 0.0
        %1135 = vmatprep.subr.mxu0 0.0
        %1136 = vmatpush1.xpose.msra.mxu0 0.0
        %1137 = vmatprep.subr.mxu0 0.0
        %1138 = vmatpush1.xpose.msra.mxu0 0.0
        %1139 = vmatprep.subr.mxu0 0.0
        %1140 = vmatpush1.xpose.msra.mxu0 0.0
        %1141 = vmatprep.subr.mxu0 0.0
        %1142 = vmatpush1.xpose.msra.mxu0 0.0
        %1143 = vmatprep.subr.mxu0 0.0
        %1144 = vmatpush1.xpose.msra.mxu0 0.0
        %1145 = vmatprep.subr.mxu0 0.0
        %1146 = vmatpush1.xpose.msra.mxu0 0.0
        %1147 = vmatprep.subr.mxu0 0.0
        %1148 = vmatpush1.xpose.msra.mxu0 0.0
        %1149 = vmatprep.subr.mxu0 0.0
        %1150 = vmatpush1.xpose.msra.mxu0 0.0
        %1151 = vmatprep.subr.mxu0 0.0
        %1152 = vmatpush1.xpose.msra.mxu0 0.0
        %1153 = vmatprep.subr.mxu0 0.0
        %1154 = vmatpush1.xpose.msra.mxu0 0.0
        %1155 = vmatprep.subr.mxu0 0.0
        %1156 = vmatpush1.xpose.msra.mxu0 0.0
        %1157 = vmatprep.subr.mxu0 0.0
        %1158 = vmatpush1.xpose.msra.mxu0 0.0
        %1159 = vmatprep.subr.mxu0 0.0
        %1160 = vmatpush1.xpose.msra.mxu0 0.0
        %1161 = vmatprep.subr.mxu0 0.0
        %1162 = vmatpush1.xpose.msra.mxu0 0.0
        %1163 = vmatprep.subr.mxu0 0.0
        %1164 = vmatpush1.xpose.msra.mxu0 0.0
        %1165 = vmatprep.subr.mxu0 0.0
        %1166 = vmatpush1.xpose.msra.mxu0 0.0
        %1167 = vmatprep.mubr.f32.mxu0 0.0
        %1168 = vmatmul.mubr.f32.gmra.mrb[0].mxu0 %v1101
        %v1169 = vpop.f32.mrb[0].mxu0
        %v1170 = vadd.f32 0.0, %v1169
        %v1171 = vpop.f32.mrb[0].mxu0
        %1172 = vdwg.mxu0
        %v1173 = vlaneseq
        %v1174 = vshrl.u32 %v1173, 7
        %v1175 = vsub.s32 0, %v1174
        %v1176 = vrot.slane %v1170, %v1175
        %v1177 = vadd.f32 %v1097, %v1176
        %v1178 = vadd.f32 %v1099, %v1176
        %vm1179 = vcmp.gt.f32.partialorder %v1177, 0.0
        %vm1180 = vcmp.gt.f32.partialorder %v1178, 0.0
        %v1181 = vmul.f32 %v1177, 0.2
        %v1182 = vmul.f32 %v1178, 0.2
        %v1183 = vsel %vm1179, %v1177, %v1181
        %v1184 = vsel %vm1180, %v1178, %v1182
        %v1185 = vsel %vm303, %v1183, -1e+12
        %v1186 = vsel %vm304, %v1184, -1e+12
        %v1187 = vsel %vm576, %v1185, -inf
        %1188 = vmax.xlane.f32.xlu0 %v1187
        %v1189 = vpop.xlane.xlu0 %1188
        %v1190 = vsel %vm576, %v1186, -inf
        %1191 = vmax.xlane.f32.xlu0 %v1190
        %v1192 = vpop.xlane.xlu0 %1191
        %v1193 = vsub.f32 %v1185, %v1189
        %v1194 = vsub.f32 %v1186, %v1192
        %v1195 = vmul.f32 %v1193, 1.442695
        %v1196 = vpow.pop %v1195
        %v1197 = vmul.f32 %v1194, 1.442695
        %v1198 = vpow.pop %v1197
        %v1199 = vsel %vm576, %v1196, 0.0
        %1200 = vadd.xlane.f32.xlu0 %v1199
        %v1201 = vpop.xlane.xlu0 %1200
        %v1202 = vsel %vm576, %v1198, 0.0
        %1203 = vadd.xlane.f32.xlu0 %v1202
        %v1204 = vpop.xlane.xlu0 %1203
        %v1206 = vsel %vm576, %v1196, 0
        %v1209 = vsel %vm576, %v1198, 0
        %1211 = vmatprep.subr.mxu0 0.0
        %1212 = vmatpush1.msra.mxu0 %v1081
        %1213 = vmatprep.subr.mxu0 0.0
        %1214 = vmatpush1.msra.mxu0 %v1086
        %1215 = vmatprep.subr.mxu0 0.0
        %1216 = vmatpush1.msra.mxu0 0.0
        %1217 = vmatprep.subr.mxu0 0.0
        %1218 = vmatpush1.msra.mxu0 0.0
        %1219 = vmatprep.subr.mxu0 0.0
        %1220 = vmatpush1.msra.mxu0 0.0
        %1221 = vmatprep.subr.mxu0 0.0
        %1222 = vmatpush1.msra.mxu0 0.0
        %1223 = vmatprep.subr.mxu0 0.0
        %1224 = vmatpush1.msra.mxu0 0.0
        %1225 = vmatprep.subr.mxu0 0.0
        %1226 = vmatpush1.msra.mxu0 0.0
        %1227 = vmatprep.subr.mxu0 0.0
        %1228 = vmatpush1.msra.mxu0 0.0
        %1229 = vmatprep.subr.mxu0 0.0
        %1230 = vmatpush1.msra.mxu0 0.0
        %1231 = vmatprep.subr.mxu0 0.0
        %1232 = vmatpush1.msra.mxu0 0.0
        %1233 = vmatprep.subr.mxu0 0.0
        %1234 = vmatpush1.msra.mxu0 0.0
        %1235 = vmatprep.subr.mxu0 0.0
        %1236 = vmatpush1.msra.mxu0 0.0
        %1237 = vmatprep.subr.mxu0 0.0
        %1238 = vmatpush1.msra.mxu0 0.0
        %1239 = vmatprep.subr.mxu0 0.0
        %1240 = vmatpush1.msra.mxu0 0.0
        %1241 = vmatprep.subr.mxu0 0.0
        %1242 = vmatpush1.msra.mxu0 0.0
        %1243 = vmatprep.subr.mxu0 0.0
        %1244 = vmatpush1.msra.mxu0 0.0
        %1245 = vmatprep.subr.mxu0 0.0
        %1246 = vmatpush1.msra.mxu0 0.0
        %1247 = vmatprep.subr.mxu0 0.0
        %1248 = vmatpush1.msra.mxu0 0.0
        %1249 = vmatprep.subr.mxu0 0.0
        %1250 = vmatpush1.msra.mxu0 0.0
        %1251 = vmatprep.subr.mxu0 0.0
        %1252 = vmatpush1.msra.mxu0 0.0
        %1253 = vmatprep.subr.mxu0 0.0
        %1254 = vmatpush1.msra.mxu0 0.0
        %1255 = vmatprep.subr.mxu0 0.0
        %1256 = vmatpush1.msra.mxu0 0.0
        %1257 = vmatprep.subr.mxu0 0.0
        %1258 = vmatpush1.msra.mxu0 0.0
        %1259 = vmatprep.subr.mxu0 0.0
        %1260 = vmatpush1.msra.mxu0 0.0
        %1261 = vmatprep.subr.mxu0 0.0
        %1262 = vmatpush1.msra.mxu0 0.0
        %1263 = vmatprep.subr.mxu0 0.0
        %1264 = vmatpush1.msra.mxu0 0.0
        %1265 = vmatprep.subr.mxu0 0.0
        %1266 = vmatpush1.msra.mxu0 0.0
        %1267 = vmatprep.subr.mxu0 0.0
        %1268 = vmatpush1.msra.mxu0 0.0
        %1269 = vmatprep.subr.mxu0 0.0
        %1270 = vmatpush1.msra.mxu0 0.0
        %1271 = vmatprep.subr.mxu0 0.0
        %1272 = vmatpush1.msra.mxu0 0.0
        %1273 = vmatprep.subr.mxu0 0.0
        %1274 = vmatpush1.msra.mxu0 0.0
        %1275 = vmatprep.mubr.f32.mxu0 0.0
        %1276 = vmatmul.mubr.f32.gmra.mrb[0].mxu0 %v1206
        %v1277 = vpop.f32.mrb[0].mxu0
        %v1278 = vadd.f32 0.0, %v1277
        %v1279 = vpop.f32.mrb[0].mxu0
        %1280 = vmatprep.mubr.f32.mxu0 0.0
        %1281 = vmatmul.mubr.f32.gmra.mrb[0].mxu0 %v1209
        %v1282 = vpop.f32.mrb[0].mxu0
        %v1283 = vadd.f32 0.0, %v1282
        %v1284 = vpop.f32.mrb[0].mxu0
        %1285 = vdwg.mxu0
        %v1286 = vrcp.pop %v1201
        %v1287 = vrcp.pop %v1204
        %v1288 = vmul.f32 %v1278, %v1286
        %v1289 = vmul.f32 %v1283, %v1287
        %vm1290 = vcmp.gt.f32.partialorder %v1288, 0.0
        %vm1291 = vcmp.gt.f32.partialorder %v1289, 0.0
        %v1292 = vmin.f32 %v1288, 0.0
        %v1293 = vmin.f32 %v1289, 0.0
        %v1294 = vmul.f32 %v1292, 1.442695
        %v1295 = vpow.pop %v1294
        %v1296 = vmul.f32 %v1293, 1.442695
        %v1297 = vpow.pop %v1296
        %v1298 = vsub.f32 %v1295, 1.0
        %v1299 = vsub.f32 %v1297, 1.0
        %v1300 = vsel %vm1290, %v1288, %v1298
        %v1301 = vsel %vm1291, %v1289, %v1299
        %v1302 = vlaneseq
        %v1303 = vand.u32 %v1302, 127
        %vm1304 = vcmp.lt.s32.totalorder %v1303, 7
        %v1305 = vsel %vm1304, %v1300, -1e+12
        %v1306 = vsel %vm1304, %v1301, -1e+12
        %1307 = vmax.xlane.f32.xlu0 %v1305
        %v1308 = vpop.xlane.xlu0 %1307
        %1309 = vmax.xlane.f32.xlu0 %v1306
        %v1310 = vpop.xlane.xlu0 %1309
        %v1311 = vsub.f32 %v1305, %v1308
        %v1312 = vsub.f32 %v1306, %v1310
        %v1313 = vmul.f32 %v1311, 1.442695
        %v1314 = vpow.pop %v1313
        %v1315 = vmul.f32 %v1312, 1.442695
        %v1316 = vpow.pop %v1315
        %v1317 = vsel %vm1304, %v1314, 0.0
        %v1318 = vsel %vm1304, %v1316, 0.0
        %1319 = vadd.xlane.f32.xlu0 %v1317
        %v1320 = vpop.xlane.xlu0 %1319
        %1321 = vadd.xlane.f32.xlu0 %v1318
        %v1322 = vpop.xlane.xlu0 %1321
        %v1323 = vlog2.pop %v1320
        %v1324 = vmul.f32 %v1323, 0.6931472
        %v1325 = vlog2.pop %v1322
        %v1326 = vmul.f32 %v1325, 0.6931472
        %v1327 = vadd.f32 %v1324, %v1308
        %v1328 = vadd.f32 %v1326, %v1310
        %v1329 = vsub.f32 %v1300, %v1327
        %v1330 = vsub.f32 %v1301, %v1328
        %1331 = vst [vmem:[%s286] sm:$0xff] %v1329
        %1332 = vst [vmem:[%s286 + $0x8] sm:$0xff] %v1330
        %s1333 = sand.u32 %s186, 1
        %s1334 = scalar_lea.sflag [#allocation4], %s1333
        %s1335 = sand.u32 %s186, 1
        %s1336 = smul.addr %s1335, 16
        %s1337 = scalar_lea.vmem [#allocation3], %s1336
        // Predicated region
        $region49: #{tpu_custom_call.1} parent=47 // pred_check
          %p1338 = pneg %p196
        $region50: #{tpu_custom_call.1} parent=47 // pred_check_branch
          %1340 = sbr.rel (%p1338) target = $region52
        $region51: #{tpu_custom_call.1} parent=47 // pred_region
          %s1342 = ssub.s32 256, 256
          %1343 = vsyncadd %s1334, %s1342
          %s1344 = smul.addr %s21, 2
          %s1345 = smul.addr %s1344, 128
          %s1346 = scalar_lea.hbm %s7, %s1345
          %s1347 = sshll.u32 %s1337, 4
          %s1348 = int_to_ptr.vmem [resolvable:$true] %s1347
          %1353 = dma.vmem_to_hbm [thread:$0]  %s1348, 256, %s1346, %s1334, 128, 128, 8
        $region52: #{tpu_custom_call.1} parent=47 // pred_fallthru
          _
      $region48: #{tpu_custom_call.1} parent=5 // pred_fallthru
        _
      %p1354 = scmp.le.s32.totalorder 2, %s16
      // Predicated region
      $region53: #{tpu_custom_call.1} parent=5 // pred_check
        %p1355 = pneg %p1354
      $region54: #{tpu_custom_call.1} parent=5 // pred_check_branch
        %1357 = sbr.rel (%p1355) target = $region56
      $region55: #{tpu_custom_call.1} parent=5 // pred_region
        %s1358 = ssub.s32 %s16, 2
        // Predicated region
        $region57: #{tpu_custom_call.1} parent=55 // pred_check
          %p1359 = pneg %p202
        $region58: #{tpu_custom_call.1} parent=55 // pred_check_branch
          %1361 = sbr.rel (%p1359) target = $region60
        $region59: #{tpu_custom_call.1} parent=55 // pred_region
          %s1362 = sand.u32 %s187, 1
          %s1363 = scalar_lea.sflag [#allocation4], %s1362
          %s1364 = sand.u32 %s187, 1
          %s1365 = smul.addr %s1364, 16
          %s1366 = scalar_lea.vmem [#allocation3], %s1365
          %1367 = dma.done %s1363, 256
        $region60: #{tpu_custom_call.1} parent=55 // pred_fallthru
          _
      $region56: #{tpu_custom_call.1} parent=5 // pred_fallthru
        _
    $region6: #{tpu_custom_call.1} parent=1 // loop_footer
      %s20 = sadd.s32 1, %s16
    $region7: #{tpu_custom_call.1} parent=1 // loop_footer_branch
      %15 = sbr.rel target = $region3
    $region8: #{tpu_custom_call.1} parent=1 // loop_exit
      _
    %1368 = vsyncpa [#allocation4], 1
    %s1369 = scalar_lea.sflag [#allocation4], 1
    %1370 = vsyncpa %s1369, 1

</llo_original>
